<compile_context>
chip_gen: v6e
topology: v6e:2x2x1
jax: 0.10.0
libtpu: 0.0.40
codegen_flags: <defaults>
</compile_context>

<pallas_src>
import functools

import jax
import jax.numpy as jnp
from jax.experimental import pallas as pl
from jax.experimental.pallas import tpu as pltpu


def _stack_conv_weight(w9):
    """(9, Cout, Cin) -> (9*R, Cin), each tap zero-padded to R=ceil8(Cout) rows.

    Tap order is (dy, dx) row-major, i.e. t = (dy+1)*3 + (dx+1); real PyTorch
    conv weights (Cout, Cin, kH, kW) must be permuted to (kH*kW, Cout, Cin) in
    exactly that order before calling this.
    """
    _, cout, cin = w9.shape
    r = -(-cout // 8) * 8
    if r != cout:
        w9 = jnp.pad(w9, ((0, 0), (0, r - cout), (0, 0)))
    return w9.reshape(9 * r, cin)


def _conv3x3_stacked(x, ws_ref, b_ref, mask, W, L):
    """3x3 conv, padding=1, channels-first on a lane-flattened spatial axis.

    x:      (Cin, L) float32, L = block_b * H * W (per-image contiguous)
    ws_ref: Ref (9*R, Cin), R rows per tap (zero-padded past Cout)
    b_ref:  Ref (Cout, 1)
    mask:   (9, L) float32 boundary-validity masks (tap (0,0) is all ones)
    """
    R = ws_ref.shape[0] // 9
    Cout = b_ref.shape[0]
    # one MXU push for all 9 taps; rolls commute with the channel matmul
    y = jnp.dot(ws_ref[...], x, preferred_element_type=jnp.float32)   # (9R, L)
    acc = jnp.zeros((R, L), jnp.float32)
    t = 0
    for dy in (-1, 0, 1):
        for dx in (-1, 0, 1):
            off = dy * W + dx
            yt = y[t * R:(t + 1) * R]                                  # (R, L)
            if off != 0:
                # rolled[:, p] == (W_t @ x)[:, p + off]
                yt = pltpu.roll(yt, shift=(-off) % L, axis=1)
            if dy == 0 and dx == 0:
                acc = acc + yt
            else:
                acc = acc + yt * mask[t:t + 1]
            t += 1
    return acc[:Cout] + b_ref[...]


def _sentiment_kernel(x_ref, m_ref, w1_ref, b1_ref, w2_ref, b2_ref,
                      sw_ref, sb_ref, p_ref, psw_ref, psb_ref,
                      cw_ref, cb_ref, dc_ref, senti_ref, *, H, W, block_b):
    HW = H * W
    L = block_b * HW
    S = p_ref.shape[0]

    x = x_ref[...]                                                  # (C0, L)
    mask = m_ref[...]                                               # (9, L)

    # conv stack (no activation between convs, matching the nn.Sequential)
    h = _conv3x3_stacked(x, w1_ref, b1_ref, mask, W, L)             # (C1, L)
    h = _conv3x3_stacked(h, w2_ref, b2_ref, mask, W, L)             # (C2, L)
    # TODO(synk): nn.Dropout is implemented as identity (eval-mode); training-mode RNG dropout is not reproduced.
    feat = jnp.maximum(h, 0.0)                                      # (C2, L)

    # senti_conv (1x1 conv == channel matmul) and the pooled feature path
    senti = jnp.dot(sw_ref[...], feat,
                    preferred_element_type=jnp.float32) + sb_ref[...]    # (SK, L)
    sf_all = jnp.dot(psw_ref[...], feat,
                     preferred_element_type=jnp.float32) + psb_ref[...]  # (S, L)

    # global max pool per image (lane-slice reductions), then SK -> S pool
    pooled_cols = [jnp.max(senti[:, b * HW:(b + 1) * HW], axis=1, keepdims=True)
                   for b in range(block_b)]
    pooled_all = jnp.concatenate(pooled_cols, axis=1)               # (SK, BB)
    det_all = jnp.dot(p_ref[...], pooled_all,
                      preferred_element_type=jnp.float32)           # (S, BB)

    # softmax over sentiments (exact division for parity with torch.softmax)
    mmax = jnp.max(det_all, axis=0, keepdims=True)
    e = jnp.exp(det_all - mmax)
    w_all = e / jnp.sum(e, axis=0, keepdims=True)                   # (S, BB)

    # weighted combine -> sentiment map; global average pools for the classifier
    inv_hw = 1.0 / float(HW)
    sm_cols, g_cols = [], []
    for b in range(block_b):
        lo = b * HW
        sf_b = sf_all[:, lo:lo + HW]                                # (S, HW)
        feat_b = feat[:, lo:lo + HW]                                # (C2, HW)
        w_b = w_all[:, b:b + 1]                                     # (S, 1)
        sm = jnp.sum(sf_b * w_b, axis=0, keepdims=True)             # (1, HW)
        sm_cols.append(sm)
        g1 = jnp.sum(feat_b, axis=1, keepdims=True)                 # (C2, 1)
        g2 = jnp.sum(feat_b * sm, axis=1, keepdims=True)            # (C2, 1)
        g_cols.append(jnp.concatenate([g1, g2], axis=0) * inv_hw)   # (2C2, 1)

    g_all = jnp.concatenate(g_cols, axis=1)                         # (2C2, BB)
    cls_all = jnp.dot(cw_ref[...], g_all,
                      preferred_element_type=jnp.float32) + cb_ref[...]  # (S, BB)

    # packed, single writebacks per grid step
    dc_ref[0] = jnp.concatenate([det_all, cls_all], axis=0)         # (2S, BB)
    senti_ref[0] = jnp.concatenate(sm_cols, axis=1)                 # (1, L)


def _num_tensorcores_per_chip():
    try:
        kind = jax.devices()[0].device_kind.lower()
    except Exception:
        return 1
    return 2 if ("v7" in kind or "7x" in kind) else 1


def _choose_block_b(B, max_bb=32):
    """Images folded onto the lane axis per grid step.

    Single-TC chips (v5e/v6e): fewest grid steps -> largest divisor of B.
    v7x (2 TCs): prefer a grid count divisible by 2 so both cores get work."""
    max_bb = min(max_bb, B)
    divisors = [bb for bb in range(1, max_bb + 1) if B % bb == 0]
    if _num_tensorcores_per_chip() >= 2:
        even_grid = [bb for bb in divisors if (B // bb) % 2 == 0]
        if even_grid:
            return max(even_grid)
    return max(divisors)


def sentiment_detector_forward(x, params, *, num_sentis, k_per_senti):
    """x: (B, H, W, C0) NHWC (same tensor the PyTorch forward receives)."""
    B, H, W, C0 = x.shape
    HW = H * W
    w1, b1, w2, b2, sw, sb, cw, cb = params
    SK = sw.shape[0]
    S = num_sentis
    K = k_per_senti

    BB = _choose_block_b(B)
    num_blocks = B // BB
    L = BB * HW

    # channels-first; batch and spatial flattened onto the lane axis
    x_cf = jnp.transpose(x, (3, 0, 1, 2)).reshape(C0, B * HW)

    # stacked conv weights: one MXU matmul per conv, 9 taps along M
    w1s = _stack_conv_weight(w1)                                    # (9*8, C0)
    w2s = _stack_conv_weight(w2)                                    # (9*8, C1)

    # 9 boundary-validity masks, host-precomputed, tiled per image (shared
    # by both convs).  Per-image masks keep lane rolls from leaking across
    # images packed on the lane axis.
    pos = jnp.arange(HW)
    xx = pos % W
    yy = pos // W
    mrows = []
    for dy in (-1, 0, 1):
        for dx in (-1, 0, 1):
            ok = (yy + dy >= 0) & (yy + dy < H) & (xx + dx >= 0) & (xx + dx < W)
            mrows.append(ok)
    masks = jnp.tile(jnp.stack(mrows).astype(jnp.float32), (1, BB))  # (9, L)

    # SK -> S adaptive-average pooling matrix; fold it into the 1x1 conv for
    # the feature path (Psw/Psb), keep P for the max-pooled det path.
    P = jnp.repeat(jnp.eye(S, dtype=jnp.float32), K, axis=1) * (1.0 / K)  # (S, SK)
    Psw = P @ sw                                                     # (S, C2)
    Psb = P @ sb                                                     # (S, 1)

    kernel = functools.partial(_sentiment_kernel, H=H, W=W, block_b=BB)

    out_shape = (
        jax.ShapeDtypeStruct((num_blocks, 2 * S, BB), jnp.float32),  # det|cls packed
        jax.ShapeDtypeStruct((num_blocks, 1, L), jnp.float32),       # sentiment map
    )

    def rep2(a):
        return pl.BlockSpec(a.shape, lambda i: (0, 0))

    grid_spec = pltpu.PrefetchScalarGridSpec(
        num_scalar_prefetch=0,
        grid=(num_blocks,),
        in_specs=[
            pl.BlockSpec((C0, L), lambda i: (0, i)),   # x block: BB images
            rep2(masks),                               # boundary masks
            rep2(w1s), rep2(b1),                       # conv_0 (stacked taps)
            rep2(w2s), rep2(b2),                       # conv_1 (stacked taps)
            rep2(sw), rep2(sb),                        # senti_conv (1x1)
            rep2(P), rep2(Psw), rep2(Psb),             # pooling matrices
            rep2(cw), rep2(cb),                        # cls Linear
        ],
        out_specs=[
            pl.BlockSpec((1, 2 * S, BB), lambda i: (i, 0, 0)),
            pl.BlockSpec((1, 1, L), lambda i: (i, 0, 0)),
        ],
    )

    dc, senti = pl.pallas_call(
        kernel,
        out_shape=out_shape,
        grid_spec=grid_spec,
        compiler_params=pltpu.CompilerParams(
            dimension_semantics=("parallel",)),
    )(x_cf, masks, w1s, b1, w2s, b2, sw, sb, P, Psw, Psb, cw, cb)

    det_out = jnp.transpose(dc[:, :S, :], (0, 2, 1)).reshape(B, S)
    cls_out = jnp.transpose(dc[:, S:, :], (0, 2, 1)).reshape(B, S)
    senti_map = senti.reshape(B, H, W)
    return (det_out, cls_out), senti_map


def init_params(key, fc_feat_dim, num_sentis, k_per_senti):
    """Deterministic synthetic parameters (sentiment_convs_num = 2), generated
    in the kernel's channels-first layout: conv weights are (9, Cout, Cin)
    with taps ordered t = (dy+1)*3 + (dx+1)."""
    C0 = fc_feat_dim
    C1 = C0 // 2
    C2 = C1 // 2
    SK = num_sentis * k_per_senti
    keys = jax.random.split(key, 8)

    def w(k, shape, fan_in):
        return jax.random.normal(k, shape, jnp.float32) / jnp.sqrt(fan_in)

    w1 = w(keys[0], (9, C1, C0), 9 * C0)        # conv_0: 3x3, C0 -> C1
    b1 = w(keys[1], (C1, 1), 9 * C0)
    w2 = w(keys[2], (9, C2, C1), 9 * C1)        # conv_1: 3x3, C1 -> C2
    b2 = w(keys[3], (C2, 1), 9 * C1)
    sw = w(keys[4], (SK, C2), C2)               # senti_conv: 1x1, C2 -> S*K
    sb = w(keys[5], (SK, 1), C2)
    cw = w(keys[6], (num_sentis, 2 * C2), 2 * C2)   # cls Linear
    cb = w(keys[7], (num_sentis, 1), 2 * C2)
    return (w1, b1, w2, b2, sw, sb, cw, cb)


if __name__ == "__main__":
    sentiment_categories = ["positive", "negative", "neutral"]
    settings = {
        "fc_feat_dim": 16,
        "sentiment_convs_num": 2,
        "dropout_p": 0.5,
        "num_kernels_per_sentiment": 4,
    }
    num_sentis = len(sentiment_categories)
    B, H, W = 2, 16, 16

    key = jax.random.PRNGKey(0)
    kx, kp = jax.random.split(key)
    x = jax.random.normal(kx, (B, H, W, settings["fc_feat_dim"]), jnp.float32)
    params = init_params(kp, settings["fc_feat_dim"], num_sentis,
                         settings["num_kernels_per_sentiment"])

    (det_out, cls_out), senti_map = sentiment_detector_forward(
        x, params, num_sentis=num_sentis,
        k_per_senti=settings["num_kernels_per_sentiment"])
    jax.block_until_ready((det_out, cls_out, senti_map))

    assert det_out.shape == (B, num_sentis)
    assert cls_out.shape == (B, num_sentis)
    assert senti_map.shape == (B, H, W)
    print("KERNEL_OK")
</pallas_src>

<mosaic_0001>
module attributes {stable_mosaic.version = 11 : i64} {
  func.func @_sentiment_kernel(%arg0: i32, %arg1: memref<16x512xf32, #tpu.memory_space<vmem>>, %arg2: memref<9x512xf32, #tpu.memory_space<vmem>>, %arg3: memref<72x16xf32, #tpu.memory_space<vmem>>, %arg4: memref<8x1xf32, #tpu.memory_space<vmem>>, %arg5: memref<72x8xf32, #tpu.memory_space<vmem>>, %arg6: memref<4x1xf32, #tpu.memory_space<vmem>>, %arg7: memref<12x4xf32, #tpu.memory_space<vmem>>, %arg8: memref<12x1xf32, #tpu.memory_space<vmem>>, %arg9: memref<3x12xf32, #tpu.memory_space<vmem>>, %arg10: memref<3x4xf32, #tpu.memory_space<vmem>>, %arg11: memref<3x1xf32, #tpu.memory_space<vmem>>, %arg12: memref<3x8xf32, #tpu.memory_space<vmem>>, %arg13: memref<3x1xf32, #tpu.memory_space<vmem>>, %arg14: memref<1x6x2xf32, #tpu.memory_space<vmem>>, %arg15: memref<1x1x512xf32, #tpu.memory_space<vmem>>) attributes {dimension_semantics = [#tpu.dimension_semantics<parallel>], iteration_bounds = array<i64: 1>, scalar_prefetch = 0 : i64, scratch_operands = 0 : i64, tpu.core_type = #tpu.core_type<tc>, window_params = [{transform_indices = @transform_0, window_bounds = array<i64: 16, 512>}, {pipeline_mode = #tpu.pipeline_mode<synchronous>, transform_indices = @transform_1, window_bounds = array<i64: 9, 512>}, {pipeline_mode = #tpu.pipeline_mode<synchronous>, transform_indices = @transform_2, window_bounds = array<i64: 72, 16>}, {pipeline_mode = #tpu.pipeline_mode<synchronous>, transform_indices = @transform_3, window_bounds = array<i64: 8, 1>}, {pipeline_mode = #tpu.pipeline_mode<synchronous>, transform_indices = @transform_4, window_bounds = array<i64: 72, 8>}, {pipeline_mode = #tpu.pipeline_mode<synchronous>, transform_indices = @transform_5, window_bounds = array<i64: 4, 1>}, {pipeline_mode = #tpu.pipeline_mode<synchronous>, transform_indices = @transform_6, window_bounds = array<i64: 12, 4>}, {pipeline_mode = #tpu.pipeline_mode<synchronous>, transform_indices = @transform_7, window_bounds = array<i64: 12, 1>}, {pipeline_mode = #tpu.pipeline_mode<synchronous>, transform_indices = @transform_8, window_bounds = array<i64: 3, 12>}, {pipeline_mode = #tpu.pipeline_mode<synchronous>, transform_indices = @transform_9, window_bounds = array<i64: 3, 4>}, {pipeline_mode = #tpu.pipeline_mode<synchronous>, transform_indices = @transform_10, window_bounds = array<i64: 3, 1>}, {pipeline_mode = #tpu.pipeline_mode<synchronous>, transform_indices = @transform_11, window_bounds = array<i64: 3, 8>}, {pipeline_mode = #tpu.pipeline_mode<synchronous>, transform_indices = @transform_12, window_bounds = array<i64: 3, 1>}, {transform_indices = @transform_13, window_bounds = array<i64: 1, 6, 2>}, {transform_indices = @transform_14, window_bounds = array<i64: 1, 1, 512>}]} {
    %c0 = arith.constant 0 : index
    %c0_0 = arith.constant 0 : index
    %0 = vector.load %arg1[%c0, %c0_0] : memref<16x512xf32, #tpu.memory_space<vmem>>, vector<16x512xf32>
    %c0_1 = arith.constant 0 : index
    %c0_2 = arith.constant 0 : index
    %1 = vector.load %arg2[%c0_1, %c0_2] : memref<9x512xf32, #tpu.memory_space<vmem>>, vector<9x512xf32>
    %c0_3 = arith.constant 0 : index
    %c0_4 = arith.constant 0 : index
    %2 = vector.load %arg3[%c0_3, %c0_4] : memref<72x16xf32, #tpu.memory_space<vmem>>, vector<72x16xf32>
    %cst = arith.constant dense<0.000000e+00> : vector<72x512xf32>
    %3 = tpu.matmul %2, %0, %cst {dimension_numbers = #tpu.dot_dimension_numbers<[1], [0], [0], [1], [0, 0, 1, 1], [], []>} : vector<72x16xf32>, vector<16x512xf32>, vector<72x512xf32> -> vector<72x512xf32>
    %cst_5 = arith.constant 0.000000e+00 : f32
    %4 = vector.broadcast %cst_5 : f32 to vector<8x512xf32>
    %5 = vector.extract_strided_slice %3 {offsets = [0, 0], sizes = [8, 512], strides = [1, 1]} : vector<72x512xf32> to vector<8x512xf32>
    %c17_i32 = arith.constant 17 : i32
    %6 = tpu.dynamic_rotate %5 by %c17_i32 dim 1 : vector<8x512xf32>, i32 -> vector<8x512xf32>
    %7 = vector.extract_strided_slice %1 {offsets = [0, 0], sizes = [1, 512], strides = [1, 1]} : vector<9x512xf32> to vector<1x512xf32>
    %8 = vector.broadcast %7 : vector<1x512xf32> to vector<8x512xf32>
    %9 = arith.mulf %6, %8 : vector<8x512xf32>
    %10 = arith.addf %4, %9 : vector<8x512xf32>
    %11 = vector.extract_strided_slice %3 {offsets = [8, 0], sizes = [8, 512], strides = [1, 1]} : vector<72x512xf32> to vector<8x512xf32>
    %c16_i32 = arith.constant 16 : i32
    %12 = tpu.dynamic_rotate %11 by %c16_i32 dim 1 : vector<8x512xf32>, i32 -> vector<8x512xf32>
    %13 = vector.extract_strided_slice %1 {offsets = [1, 0], sizes = [1, 512], strides = [1, 1]} : vector<9x512xf32> to vector<1x512xf32>
    %14 = vector.broadcast %13 : vector<1x512xf32> to vector<8x512xf32>
    %15 = arith.mulf %12, %14 : vector<8x512xf32>
    %16 = arith.addf %10, %15 : vector<8x512xf32>
    %17 = vector.extract_strided_slice %3 {offsets = [16, 0], sizes = [8, 512], strides = [1, 1]} : vector<72x512xf32> to vector<8x512xf32>
    %c15_i32 = arith.constant 15 : i32
    %18 = tpu.dynamic_rotate %17 by %c15_i32 dim 1 : vector<8x512xf32>, i32 -> vector<8x512xf32>
    %19 = vector.extract_strided_slice %1 {offsets = [2, 0], sizes = [1, 512], strides = [1, 1]} : vector<9x512xf32> to vector<1x512xf32>
    %20 = vector.broadcast %19 : vector<1x512xf32> to vector<8x512xf32>
    %21 = arith.mulf %18, %20 : vector<8x512xf32>
    %22 = arith.addf %16, %21 : vector<8x512xf32>
    %23 = vector.extract_strided_slice %3 {offsets = [24, 0], sizes = [8, 512], strides = [1, 1]} : vector<72x512xf32> to vector<8x512xf32>
    %c1_i32 = arith.constant 1 : i32
    %24 = tpu.dynamic_rotate %23 by %c1_i32 dim 1 : vector<8x512xf32>, i32 -> vector<8x512xf32>
    %25 = vector.extract_strided_slice %1 {offsets = [3, 0], sizes = [1, 512], strides = [1, 1]} : vector<9x512xf32> to vector<1x512xf32>
    %26 = vector.broadcast %25 : vector<1x512xf32> to vector<8x512xf32>
    %27 = arith.mulf %24, %26 : vector<8x512xf32>
    %28 = arith.addf %22, %27 : vector<8x512xf32>
    %29 = vector.extract_strided_slice %3 {offsets = [32, 0], sizes = [8, 512], strides = [1, 1]} : vector<72x512xf32> to vector<8x512xf32>
    %30 = arith.addf %28, %29 : vector<8x512xf32>
    %31 = vector.extract_strided_slice %3 {offsets = [40, 0], sizes = [8, 512], strides = [1, 1]} : vector<72x512xf32> to vector<8x512xf32>
    %c511_i32 = arith.constant 511 : i32
    %32 = tpu.dynamic_rotate %31 by %c511_i32 dim 1 : vector<8x512xf32>, i32 -> vector<8x512xf32>
    %33 = vector.extract_strided_slice %1 {offsets = [5, 0], sizes = [1, 512], strides = [1, 1]} : vector<9x512xf32> to vector<1x512xf32>
    %34 = vector.broadcast %33 : vector<1x512xf32> to vector<8x512xf32>
    %35 = arith.mulf %32, %34 : vector<8x512xf32>
    %36 = arith.addf %30, %35 : vector<8x512xf32>
    %37 = vector.extract_strided_slice %3 {offsets = [48, 0], sizes = [8, 512], strides = [1, 1]} : vector<72x512xf32> to vector<8x512xf32>
    %c497_i32 = arith.constant 497 : i32
    %38 = tpu.dynamic_rotate %37 by %c497_i32 dim 1 : vector<8x512xf32>, i32 -> vector<8x512xf32>
    %39 = vector.extract_strided_slice %1 {offsets = [6, 0], sizes = [1, 512], strides = [1, 1]} : vector<9x512xf32> to vector<1x512xf32>
    %40 = vector.broadcast %39 : vector<1x512xf32> to vector<8x512xf32>
    %41 = arith.mulf %38, %40 : vector<8x512xf32>
    %42 = arith.addf %36, %41 : vector<8x512xf32>
    %43 = vector.extract_strided_slice %3 {offsets = [56, 0], sizes = [8, 512], strides = [1, 1]} : vector<72x512xf32> to vector<8x512xf32>
    %c496_i32 = arith.constant 496 : i32
    %44 = tpu.dynamic_rotate %43 by %c496_i32 dim 1 : vector<8x512xf32>, i32 -> vector<8x512xf32>
    %45 = vector.extract_strided_slice %1 {offsets = [7, 0], sizes = [1, 512], strides = [1, 1]} : vector<9x512xf32> to vector<1x512xf32>
    %46 = vector.broadcast %45 : vector<1x512xf32> to vector<8x512xf32>
    %47 = arith.mulf %44, %46 : vector<8x512xf32>
    %48 = arith.addf %42, %47 : vector<8x512xf32>
    %49 = vector.extract_strided_slice %3 {offsets = [64, 0], sizes = [8, 512], strides = [1, 1]} : vector<72x512xf32> to vector<8x512xf32>
    %c495_i32 = arith.constant 495 : i32
    %50 = tpu.dynamic_rotate %49 by %c495_i32 dim 1 : vector<8x512xf32>, i32 -> vector<8x512xf32>
    %51 = vector.extract_strided_slice %1 {offsets = [8, 0], sizes = [1, 512], strides = [1, 1]} : vector<9x512xf32> to vector<1x512xf32>
    %52 = vector.broadcast %51 : vector<1x512xf32> to vector<8x512xf32>
    %53 = arith.mulf %50, %52 : vector<8x512xf32>
    %54 = arith.addf %48, %53 : vector<8x512xf32>
    %c0_6 = arith.constant 0 : index
    %c0_7 = arith.constant 0 : index
    %55 = vector.load %arg4[%c0_6, %c0_7] : memref<8x1xf32, #tpu.memory_space<vmem>>, vector<8x1xf32>
    %56 = vector.broadcast %55 : vector<8x1xf32> to vector<8x512xf32>
    %57 = arith.addf %54, %56 : vector<8x512xf32>
    %c0_8 = arith.constant 0 : index
    %c0_9 = arith.constant 0 : index
    %58 = vector.load %arg5[%c0_8, %c0_9] : memref<72x8xf32, #tpu.memory_space<vmem>>, vector<72x8xf32>
    %cst_10 = arith.constant dense<0.000000e+00> : vector<72x512xf32>
    %59 = tpu.matmul %58, %57, %cst_10 {dimension_numbers = #tpu.dot_dimension_numbers<[1], [0], [0], [1], [0, 0, 1, 1], [], []>} : vector<72x8xf32>, vector<8x512xf32>, vector<72x512xf32> -> vector<72x512xf32>
    %cst_11 = arith.constant 0.000000e+00 : f32
    %60 = vector.broadcast %cst_11 : f32 to vector<8x512xf32>
    %61 = vector.extract_strided_slice %59 {offsets = [0, 0], sizes = [8, 512], strides = [1, 1]} : vector<72x512xf32> to vector<8x512xf32>
    %c17_i32_12 = arith.constant 17 : i32
    %62 = tpu.dynamic_rotate %61 by %c17_i32_12 dim 1 : vector<8x512xf32>, i32 -> vector<8x512xf32>
    %63 = vector.extract_strided_slice %1 {offsets = [0, 0], sizes = [1, 512], strides = [1, 1]} : vector<9x512xf32> to vector<1x512xf32>
    %64 = vector.broadcast %63 : vector<1x512xf32> to vector<8x512xf32>
    %65 = arith.mulf %62, %64 : vector<8x512xf32>
    %66 = arith.addf %60, %65 : vector<8x512xf32>
    %67 = vector.extract_strided_slice %59 {offsets = [8, 0], sizes = [8, 512], strides = [1, 1]} : vector<72x512xf32> to vector<8x512xf32>
    %c16_i32_13 = arith.constant 16 : i32
    %68 = tpu.dynamic_rotate %67 by %c16_i32_13 dim 1 : vector<8x512xf32>, i32 -> vector<8x512xf32>
    %69 = vector.extract_strided_slice %1 {offsets = [1, 0], sizes = [1, 512], strides = [1, 1]} : vector<9x512xf32> to vector<1x512xf32>
    %70 = vector.broadcast %69 : vector<1x512xf32> to vector<8x512xf32>
    %71 = arith.mulf %68, %70 : vector<8x512xf32>
    %72 = arith.addf %66, %71 : vector<8x512xf32>
    %73 = vector.extract_strided_slice %59 {offsets = [16, 0], sizes = [8, 512], strides = [1, 1]} : vector<72x512xf32> to vector<8x512xf32>
    %c15_i32_14 = arith.constant 15 : i32
    %74 = tpu.dynamic_rotate %73 by %c15_i32_14 dim 1 : vector<8x512xf32>, i32 -> vector<8x512xf32>
    %75 = vector.extract_strided_slice %1 {offsets = [2, 0], sizes = [1, 512], strides = [1, 1]} : vector<9x512xf32> to vector<1x512xf32>
    %76 = vector.broadcast %75 : vector<1x512xf32> to vector<8x512xf32>
    %77 = arith.mulf %74, %76 : vector<8x512xf32>
    %78 = arith.addf %72, %77 : vector<8x512xf32>
    %79 = vector.extract_strided_slice %59 {offsets = [24, 0], sizes = [8, 512], strides = [1, 1]} : vector<72x512xf32> to vector<8x512xf32>
    %c1_i32_15 = arith.constant 1 : i32
    %80 = tpu.dynamic_rotate %79 by %c1_i32_15 dim 1 : vector<8x512xf32>, i32 -> vector<8x512xf32>
    %81 = vector.extract_strided_slice %1 {offsets = [3, 0], sizes = [1, 512], strides = [1, 1]} : vector<9x512xf32> to vector<1x512xf32>
    %82 = vector.broadcast %81 : vector<1x512xf32> to vector<8x512xf32>
    %83 = arith.mulf %80, %82 : vector<8x512xf32>
    %84 = arith.addf %78, %83 : vector<8x512xf32>
    %85 = vector.extract_strided_slice %59 {offsets = [32, 0], sizes = [8, 512], strides = [1, 1]} : vector<72x512xf32> to vector<8x512xf32>
    %86 = arith.addf %84, %85 : vector<8x512xf32>
    %87 = vector.extract_strided_slice %59 {offsets = [40, 0], sizes = [8, 512], strides = [1, 1]} : vector<72x512xf32> to vector<8x512xf32>
    %c511_i32_16 = arith.constant 511 : i32
    %88 = tpu.dynamic_rotate %87 by %c511_i32_16 dim 1 : vector<8x512xf32>, i32 -> vector<8x512xf32>
    %89 = vector.extract_strided_slice %1 {offsets = [5, 0], sizes = [1, 512], strides = [1, 1]} : vector<9x512xf32> to vector<1x512xf32>
    %90 = vector.broadcast %89 : vector<1x512xf32> to vector<8x512xf32>
    %91 = arith.mulf %88, %90 : vector<8x512xf32>
    %92 = arith.addf %86, %91 : vector<8x512xf32>
    %93 = vector.extract_strided_slice %59 {offsets = [48, 0], sizes = [8, 512], strides = [1, 1]} : vector<72x512xf32> to vector<8x512xf32>
    %c497_i32_17 = arith.constant 497 : i32
    %94 = tpu.dynamic_rotate %93 by %c497_i32_17 dim 1 : vector<8x512xf32>, i32 -> vector<8x512xf32>
    %95 = vector.extract_strided_slice %1 {offsets = [6, 0], sizes = [1, 512], strides = [1, 1]} : vector<9x512xf32> to vector<1x512xf32>
    %96 = vector.broadcast %95 : vector<1x512xf32> to vector<8x512xf32>
    %97 = arith.mulf %94, %96 : vector<8x512xf32>
    %98 = arith.addf %92, %97 : vector<8x512xf32>
    %99 = vector.extract_strided_slice %59 {offsets = [56, 0], sizes = [8, 512], strides = [1, 1]} : vector<72x512xf32> to vector<8x512xf32>
    %c496_i32_18 = arith.constant 496 : i32
    %100 = tpu.dynamic_rotate %99 by %c496_i32_18 dim 1 : vector<8x512xf32>, i32 -> vector<8x512xf32>
    %101 = vector.extract_strided_slice %1 {offsets = [7, 0], sizes = [1, 512], strides = [1, 1]} : vector<9x512xf32> to vector<1x512xf32>
    %102 = vector.broadcast %101 : vector<1x512xf32> to vector<8x512xf32>
    %103 = arith.mulf %100, %102 : vector<8x512xf32>
    %104 = arith.addf %98, %103 : vector<8x512xf32>
    %105 = vector.extract_strided_slice %59 {offsets = [64, 0], sizes = [8, 512], strides = [1, 1]} : vector<72x512xf32> to vector<8x512xf32>
    %c495_i32_19 = arith.constant 495 : i32
    %106 = tpu.dynamic_rotate %105 by %c495_i32_19 dim 1 : vector<8x512xf32>, i32 -> vector<8x512xf32>
    %107 = vector.extract_strided_slice %1 {offsets = [8, 0], sizes = [1, 512], strides = [1, 1]} : vector<9x512xf32> to vector<1x512xf32>
    %108 = vector.broadcast %107 : vector<1x512xf32> to vector<8x512xf32>
    %109 = arith.mulf %106, %108 : vector<8x512xf32>
    %110 = arith.addf %104, %109 : vector<8x512xf32>
    %111 = vector.extract_strided_slice %110 {offsets = [0, 0], sizes = [4, 512], strides = [1, 1]} : vector<8x512xf32> to vector<4x512xf32>
    %c0_20 = arith.constant 0 : index
    %c0_21 = arith.constant 0 : index
    %112 = vector.load %arg6[%c0_20, %c0_21] : memref<4x1xf32, #tpu.memory_space<vmem>>, vector<4x1xf32>
    %113 = vector.broadcast %112 : vector<4x1xf32> to vector<4x512xf32>
    %114 = arith.addf %111, %113 : vector<4x512xf32>
    %cst_22 = arith.constant 0.000000e+00 : f32
    %115 = vector.broadcast %cst_22 : f32 to vector<4x512xf32>
    %116 = arith.maximumf %114, %115 : vector<4x512xf32>
    %c0_23 = arith.constant 0 : index
    %c0_24 = arith.constant 0 : index
    %117 = vector.load %arg7[%c0_23, %c0_24] : memref<12x4xf32, #tpu.memory_space<vmem>>, vector<12x4xf32>
    %cst_25 = arith.constant dense<0.000000e+00> : vector<12x512xf32>
    %118 = tpu.matmul %117, %116, %cst_25 {dimension_numbers = #tpu.dot_dimension_numbers<[1], [0], [0], [1], [0, 0, 1, 1], [], []>} : vector<12x4xf32>, vector<4x512xf32>, vector<12x512xf32> -> vector<12x512xf32>
    %c0_26 = arith.constant 0 : index
    %c0_27 = arith.constant 0 : index
    %119 = vector.load %arg8[%c0_26, %c0_27] : memref<12x1xf32, #tpu.memory_space<vmem>>, vector<12x1xf32>
    %120 = vector.broadcast %119 : vector<12x1xf32> to vector<12x512xf32>
    %121 = arith.addf %118, %120 : vector<12x512xf32>
    %c0_28 = arith.constant 0 : index
    %c0_29 = arith.constant 0 : index
    %122 = vector.load %arg10[%c0_28, %c0_29] : memref<3x4xf32, #tpu.memory_space<vmem>>, vector<3x4xf32>
    %cst_30 = arith.constant dense<0.000000e+00> : vector<3x512xf32>
    %123 = tpu.matmul %122, %116, %cst_30 {dimension_numbers = #tpu.dot_dimension_numbers<[1], [0], [0], [1], [0, 0, 1, 1], [], []>} : vector<3x4xf32>, vector<4x512xf32>, vector<3x512xf32> -> vector<3x512xf32>
    %c0_31 = arith.constant 0 : index
    %c0_32 = arith.constant 0 : index
    %124 = vector.load %arg11[%c0_31, %c0_32] : memref<3x1xf32, #tpu.memory_space<vmem>>, vector<3x1xf32>
    %125 = vector.broadcast %124 : vector<3x1xf32> to vector<3x512xf32>
    %126 = arith.addf %123, %125 : vector<3x512xf32>
    %127 = vector.extract_strided_slice %121 {offsets = [0, 0], sizes = [12, 256], strides = [1, 1]} : vector<12x512xf32> to vector<12x256xf32>
    %cst_33 = arith.constant dense<0xFF800000> : vector<12xf32>
    %128 = vector.multi_reduction <maximumf>, %127, %cst_33 [1] : vector<12x256xf32> to vector<12xf32>
    %129 = vector.shape_cast %128 : vector<12xf32> to vector<12x1xf32>
    %130 = vector.extract_strided_slice %121 {offsets = [0, 256], sizes = [12, 256], strides = [1, 1]} : vector<12x512xf32> to vector<12x256xf32>
    %cst_34 = arith.constant dense<0xFF800000> : vector<12xf32>
    %131 = vector.multi_reduction <maximumf>, %130, %cst_34 [1] : vector<12x256xf32> to vector<12xf32>
    %132 = vector.shape_cast %131 : vector<12xf32> to vector<12x1xf32>
    %133 = tpu.concatenate %129, %132 in 1 : vector<12x1xf32>, vector<12x1xf32> -> vector<12x2xf32>
    %c0_35 = arith.constant 0 : index
    %c0_36 = arith.constant 0 : index
    %134 = vector.load %arg9[%c0_35, %c0_36] : memref<3x12xf32, #tpu.memory_space<vmem>>, vector<3x12xf32>
    %cst_37 = arith.constant dense<0.000000e+00> : vector<3x2xf32>
    %135 = tpu.matmul %134, %133, %cst_37 {dimension_numbers = #tpu.dot_dimension_numbers<[1], [0], [0], [1], [0, 0, 1, 1], [], []>} : vector<3x12xf32>, vector<12x2xf32>, vector<3x2xf32> -> vector<3x2xf32>
    %cst_38 = arith.constant dense<0xFF800000> : vector<2xf32>
    %136 = vector.multi_reduction <maximumf>, %135, %cst_38 [0] : vector<3x2xf32> to vector<2xf32>
    %137 = vector.shape_cast %136 : vector<2xf32> to vector<1x2xf32>
    %138 = vector.broadcast %137 : vector<1x2xf32> to vector<3x2xf32>
    %139 = arith.subf %135, %138 : vector<3x2xf32>
    %140 = math.exp %139 : vector<3x2xf32>
    %cst_39 = arith.constant dense<0.000000e+00> : vector<2xf32>
    %141 = vector.multi_reduction <add>, %140, %cst_39 [0] : vector<3x2xf32> to vector<2xf32>
    %142 = vector.shape_cast %141 : vector<2xf32> to vector<1x2xf32>
    %143 = vector.broadcast %142 : vector<1x2xf32> to vector<3x2xf32>
    %144 = arith.divf %140, %143 : vector<3x2xf32>
    %145 = vector.extract_strided_slice %126 {offsets = [0, 0], sizes = [3, 256], strides = [1, 1]} : vector<3x512xf32> to vector<3x256xf32>
    %146 = vector.extract_strided_slice %116 {offsets = [0, 0], sizes = [4, 256], strides = [1, 1]} : vector<4x512xf32> to vector<4x256xf32>
    %147 = vector.extract_strided_slice %144 {offsets = [0, 0], sizes = [3, 1], strides = [1, 1]} : vector<3x2xf32> to vector<3x1xf32>
    %148 = vector.broadcast %147 : vector<3x1xf32> to vector<3x256xf32>
    %149 = arith.mulf %145, %148 : vector<3x256xf32>
    %cst_40 = arith.constant dense<0.000000e+00> : vector<256xf32>
    %150 = vector.multi_reduction <add>, %149, %cst_40 [0] : vector<3x256xf32> to vector<256xf32>
    %151 = vector.shape_cast %150 : vector<256xf32> to vector<1x256xf32>
    %cst_41 = arith.constant dense<0.000000e+00> : vector<4xf32>
    %152 = vector.multi_reduction <add>, %146, %cst_41 [1] : vector<4x256xf32> to vector<4xf32>
    %153 = vector.shape_cast %152 : vector<4xf32> to vector<4x1xf32>
    %154 = vector.broadcast %151 : vector<1x256xf32> to vector<4x256xf32>
    %155 = arith.mulf %146, %154 : vector<4x256xf32>
    %cst_42 = arith.constant dense<0.000000e+00> : vector<4xf32>
    %156 = vector.multi_reduction <add>, %155, %cst_42 [1] : vector<4x256xf32> to vector<4xf32>
    %157 = vector.shape_cast %156 : vector<4xf32> to vector<4x1xf32>
    %158 = tpu.concatenate %153, %157 in 0 : vector<4x1xf32>, vector<4x1xf32> -> vector<8x1xf32>
    %cst_43 = arith.constant 3.906250e-03 : f32
    %159 = vector.broadcast %cst_43 : f32 to vector<8x1xf32>
    %160 = arith.mulf %158, %159 : vector<8x1xf32>
    %161 = vector.extract_strided_slice %126 {offsets = [0, 256], sizes = [3, 256], strides = [1, 1]} : vector<3x512xf32> to vector<3x256xf32>
    %162 = vector.extract_strided_slice %116 {offsets = [0, 256], sizes = [4, 256], strides = [1, 1]} : vector<4x512xf32> to vector<4x256xf32>
    %163 = vector.extract_strided_slice %144 {offsets = [0, 1], sizes = [3, 1], strides = [1, 1]} : vector<3x2xf32> to vector<3x1xf32>
    %164 = vector.broadcast %163 : vector<3x1xf32> to vector<3x256xf32>
    %165 = arith.mulf %161, %164 : vector<3x256xf32>
    %cst_44 = arith.constant dense<0.000000e+00> : vector<256xf32>
    %166 = vector.multi_reduction <add>, %165, %cst_44 [0] : vector<3x256xf32> to vector<256xf32>
    %167 = vector.shape_cast %166 : vector<256xf32> to vector<1x256xf32>
    %cst_45 = arith.constant dense<0.000000e+00> : vector<4xf32>
    %168 = vector.multi_reduction <add>, %162, %cst_45 [1] : vector<4x256xf32> to vector<4xf32>
    %169 = vector.shape_cast %168 : vector<4xf32> to vector<4x1xf32>
    %170 = vector.broadcast %167 : vector<1x256xf32> to vector<4x256xf32>
    %171 = arith.mulf %162, %170 : vector<4x256xf32>
    %cst_46 = arith.constant dense<0.000000e+00> : vector<4xf32>
    %172 = vector.multi_reduction <add>, %171, %cst_46 [1] : vector<4x256xf32> to vector<4xf32>
    %173 = vector.shape_cast %172 : vector<4xf32> to vector<4x1xf32>
    %174 = tpu.concatenate %169, %173 in 0 : vector<4x1xf32>, vector<4x1xf32> -> vector<8x1xf32>
    %cst_47 = arith.constant 3.906250e-03 : f32
    %175 = vector.broadcast %cst_47 : f32 to vector<8x1xf32>
    %176 = arith.mulf %174, %175 : vector<8x1xf32>
    %177 = tpu.concatenate %160, %176 in 1 : vector<8x1xf32>, vector<8x1xf32> -> vector<8x2xf32>
    %c0_48 = arith.constant 0 : index
    %c0_49 = arith.constant 0 : index
    %178 = vector.load %arg12[%c0_48, %c0_49] : memref<3x8xf32, #tpu.memory_space<vmem>>, vector<3x8xf32>
    %cst_50 = arith.constant dense<0.000000e+00> : vector<3x2xf32>
    %179 = tpu.matmul %178, %177, %cst_50 {dimension_numbers = #tpu.dot_dimension_numbers<[1], [0], [0], [1], [0, 0, 1, 1], [], []>} : vector<3x8xf32>, vector<8x2xf32>, vector<3x2xf32> -> vector<3x2xf32>
    %c0_51 = arith.constant 0 : index
    %c0_52 = arith.constant 0 : index
    %180 = vector.load %arg13[%c0_51, %c0_52] : memref<3x1xf32, #tpu.memory_space<vmem>>, vector<3x1xf32>
    %181 = vector.broadcast %180 : vector<3x1xf32> to vector<3x2xf32>
    %182 = arith.addf %179, %181 : vector<3x2xf32>
    %183 = tpu.concatenate %135, %182 in 0 : vector<3x2xf32>, vector<3x2xf32> -> vector<6x2xf32>
    %c0_53 = arith.constant 0 : index
    %c0_54 = arith.constant 0 : index
    %c0_55 = arith.constant 0 : index
    %184 = vector.load %arg14[%c0_53, %c0_54, %c0_55] : memref<1x6x2xf32, #tpu.memory_space<vmem>>, vector<1x6x2xf32>
    %185 = vector.shape_cast %184 : vector<1x6x2xf32> to vector<6x2xf32>
    %186 = vector.shape_cast %183 : vector<6x2xf32> to vector<1x6x2xf32>
    tpu.vector_store %arg14[%c0_53, %c0_54, %c0_55], %186 {strides = array<i32>} : memref<1x6x2xf32, #tpu.memory_space<vmem>>, vector<1x6x2xf32>,
    %187 = tpu.concatenate %151, %167 in 1 : vector<1x256xf32>, vector<1x256xf32> -> vector<1x512xf32>
    %c0_56 = arith.constant 0 : index
    %c0_57 = arith.constant 0 : index
    %c0_58 = arith.constant 0 : index
    %188 = vector.load %arg15[%c0_56, %c0_57, %c0_58] : memref<1x1x512xf32, #tpu.memory_space<vmem>>, vector<1x1x512xf32>
    %189 = vector.shape_cast %188 : vector<1x1x512xf32> to vector<1x512xf32>
    %190 = vector.shape_cast %187 : vector<1x512xf32> to vector<1x1x512xf32>
    tpu.vector_store %arg15[%c0_56, %c0_57, %c0_58], %190 {strides = array<i32>} : memref<1x1x512xf32, #tpu.memory_space<vmem>>, vector<1x1x512xf32>,
    return
  }
  func.func @transform_0(%arg0: i32) -> (i32, i32) {
    %c0_i32 = arith.constant 0 : i32
    %c0_i32_0 = arith.constant 0 : i32
    return %c0_i32, %arg0 : i32, i32
  }
  func.func @transform_1(%arg0: i32) -> (i32, i32) {
    %c0_i32 = arith.constant 0 : i32
    %c0_i32_0 = arith.constant 0 : i32
    %c0_i32_1 = arith.constant 0 : i32
    return %c0_i32, %c0_i32_0 : i32, i32
  }
  func.func @transform_2(%arg0: i32) -> (i32, i32) {
    %c0_i32 = arith.constant 0 : i32
    %c0_i32_0 = arith.constant 0 : i32
    %c0_i32_1 = arith.constant 0 : i32
    return %c0_i32, %c0_i32_0 : i32, i32
  }
  func.func @transform_3(%arg0: i32) -> (i32, i32) {
    %c0_i32 = arith.constant 0 : i32
    %c0_i32_0 = arith.constant 0 : i32
    %c0_i32_1 = arith.constant 0 : i32
    return %c0_i32, %c0_i32_0 : i32, i32
  }
  func.func @transform_4(%arg0: i32) -> (i32, i32) {
    %c0_i32 = arith.constant 0 : i32
    %c0_i32_0 = arith.constant 0 : i32
    %c0_i32_1 = arith.constant 0 : i32
    return %c0_i32, %c0_i32_0 : i32, i32
  }
  func.func @transform_5(%arg0: i32) -> (i32, i32) {
    %c0_i32 = arith.constant 0 : i32
    %c0_i32_0 = arith.constant 0 : i32
    %c0_i32_1 = arith.constant 0 : i32
    return %c0_i32, %c0_i32_0 : i32, i32
  }
  func.func @transform_6(%arg0: i32) -> (i32, i32) {
    %c0_i32 = arith.constant 0 : i32
    %c0_i32_0 = arith.constant 0 : i32
    %c0_i32_1 = arith.constant 0 : i32
    return %c0_i32, %c0_i32_0 : i32, i32
  }
  func.func @transform_7(%arg0: i32) -> (i32, i32) {
    %c0_i32 = arith.constant 0 : i32
    %c0_i32_0 = arith.constant 0 : i32
    %c0_i32_1 = arith.constant 0 : i32
    return %c0_i32, %c0_i32_0 : i32, i32
  }
  func.func @transform_8(%arg0: i32) -> (i32, i32) {
    %c0_i32 = arith.constant 0 : i32
    %c0_i32_0 = arith.constant 0 : i32
    %c0_i32_1 = arith.constant 0 : i32
    return %c0_i32, %c0_i32_0 : i32, i32
  }
  func.func @transform_9(%arg0: i32) -> (i32, i32) {
    %c0_i32 = arith.constant 0 : i32
    %c0_i32_0 = arith.constant 0 : i32
    %c0_i32_1 = arith.constant 0 : i32
    return %c0_i32, %c0_i32_0 : i32, i32
  }
  func.func @transform_10(%arg0: i32) -> (i32, i32) {
    %c0_i32 = arith.constant 0 : i32
    %c0_i32_0 = arith.constant 0 : i32
    %c0_i32_1 = arith.constant 0 : i32
    return %c0_i32, %c0_i32_0 : i32, i32
  }
  func.func @transform_11(%arg0: i32) -> (i32, i32) {
    %c0_i32 = arith.constant 0 : i32
    %c0_i32_0 = arith.constant 0 : i32
    %c0_i32_1 = arith.constant 0 : i32
    return %c0_i32, %c0_i32_0 : i32, i32
  }
  func.func @transform_12(%arg0: i32) -> (i32, i32) {
    %c0_i32 = arith.constant 0 : i32
    %c0_i32_0 = arith.constant 0 : i32
    %c0_i32_1 = arith.constant 0 : i32
    return %c0_i32, %c0_i32_0 : i32, i32
  }
  func.func @transform_13(%arg0: i32) -> (i32, i32, i32) {
    %c0_i32 = arith.constant 0 : i32
    %c0_i32_0 = arith.constant 0 : i32
    %c0_i32_1 = arith.constant 0 : i32
    return %arg0, %c0_i32, %c0_i32_0 : i32, i32, i32
  }
  func.func @transform_14(%arg0: i32) -> (i32, i32, i32) {
    %c0_i32 = arith.constant 0 : i32
    %c0_i32_0 = arith.constant 0 : i32
    %c0_i32_1 = arith.constant 0 : i32
    return %arg0, %c0_i32, %c0_i32_0 : i32, i32, i32
  }
}

</mosaic_0001>

<llo_original>
// kernel: tpu_custom_call.1
$region0: #{tpu_custom_call.1}
  #allocation0 [shape = 'u32[]', space=smem, size = 0x4, offset = 0x4, fixed_abs, tag = 'smem constant byte address 0x4 - core index']
  #allocation1 [shape = 'u32[144,128]{1,0:T(1,128)}', space=vmem, size = 0x12000, scoped, tag = 'internal scratch']
  %s0 = inlined_call_operand.vmem [shape: f32[16,512], index: 0, kind: input, shape index: {}]
  %s1 = inlined_call_operand.vmem [shape: f32[9,512], index: 1, kind: input, shape index: {}]
  %s2 = inlined_call_operand.vmem [shape: f32[72,16], index: 2, kind: input, shape index: {}]
  %s3 = inlined_call_operand.vmem [shape: f32[8,1], index: 3, kind: input, shape index: {}]
  %s4 = inlined_call_operand.vmem [shape: f32[72,8], index: 4, kind: input, shape index: {}]
  %s5 = inlined_call_operand.vmem [shape: f32[4,1], index: 5, kind: input, shape index: {}]
  %s6 = inlined_call_operand.vmem [shape: f32[12,4], index: 6, kind: input, shape index: {}]
  %s7 = inlined_call_operand.vmem [shape: f32[12,1], index: 7, kind: input, shape index: {}]
  %s8 = inlined_call_operand.vmem [shape: f32[3,12], index: 8, kind: input, shape index: {}]
  %s9 = inlined_call_operand.vmem [shape: f32[3,4], index: 9, kind: input, shape index: {}]
  %s10 = inlined_call_operand.vmem [shape: f32[3,1], index: 10, kind: input, shape index: {}]
  %s11 = inlined_call_operand.vmem [shape: f32[3,8], index: 11, kind: input, shape index: {}]
  %s12 = inlined_call_operand.vmem [shape: f32[3,1], index: 12, kind: input, shape index: {}]
  %s13 = inlined_call_operand.vmem [shape: f32[1,6,2], index: 13, kind: output, shape index: {0}]
  %s14 = inlined_call_operand.hbm [shape: f32[1,1,512], index: 14, kind: output, shape index: {1}]
  %15 = xla_tuple %s13, %s14
  %s16 = sld [smem:[#allocation0]]
  $region70: #{tpu_custom_call.1} parent=0
    _
  %s18 = ssub.s32 1, %s16
  %s19 = scalar_select 0, %s18, %s16
  $region1: #{tpu_custom_call.1} parent=0
    #allocation2 [shape = 'u8[2048]{0}', space=vmem, size = 0x800, scoped, tag = 'output window, operand 1, single buffered']
    #allocation3 [shape = 's32[1]{0}', space=sflag, size = 0x4, scoped, tag = 'scoped memory for tpu_custom_call.1']
    %20 = vsyncpa [#allocation3], 0
    // Predicated region
    $region2: #{tpu_custom_call.1} parent=1 // pred_check
      _
    $region3: #{tpu_custom_call.1} parent=1 // pred_check_branch
      %22 = sbr.rel (0) target = $region5
    $region4: #{tpu_custom_call.1} parent=1 // pred_region
      _
    $region5: #{tpu_custom_call.1} parent=1 // pred_fallthru
      _
    // Predicated region
    $region6: #{tpu_custom_call.1} parent=1 // pred_check
      _
    $region7: #{tpu_custom_call.1} parent=1 // pred_check_branch
      %24 = sbr.rel (0) target = $region9
    $region8: #{tpu_custom_call.1} parent=1 // pred_region
      _
    $region9: #{tpu_custom_call.1} parent=1 // pred_fallthru
      _
    // Predicated region
    $region10: #{tpu_custom_call.1} parent=1 // pred_check
      _
    $region11: #{tpu_custom_call.1} parent=1 // pred_check_branch
      %26 = sbr.rel (0) target = $region13
    $region12: #{tpu_custom_call.1} parent=1 // pred_region
      _
    $region13: #{tpu_custom_call.1} parent=1 // pred_fallthru
      _
    // Predicated region
    $region14: #{tpu_custom_call.1} parent=1 // pred_check
      _
    $region15: #{tpu_custom_call.1} parent=1 // pred_check_branch
      %28 = sbr.rel (0) target = $region17
    $region16: #{tpu_custom_call.1} parent=1 // pred_region
      _
    $region17: #{tpu_custom_call.1} parent=1 // pred_fallthru
      _
    // Predicated region
    $region18: #{tpu_custom_call.1} parent=1 // pred_check
      _
    $region19: #{tpu_custom_call.1} parent=1 // pred_check_branch
      %30 = sbr.rel (0) target = $region21
    $region20: #{tpu_custom_call.1} parent=1 // pred_region
      _
    $region21: #{tpu_custom_call.1} parent=1 // pred_fallthru
      _
    // Predicated region
    $region22: #{tpu_custom_call.1} parent=1 // pred_check
      _
    $region23: #{tpu_custom_call.1} parent=1 // pred_check_branch
      %32 = sbr.rel (0) target = $region25
    $region24: #{tpu_custom_call.1} parent=1 // pred_region
      _
    $region25: #{tpu_custom_call.1} parent=1 // pred_fallthru
      _
    // Predicated region
    $region26: #{tpu_custom_call.1} parent=1 // pred_check
      _
    $region27: #{tpu_custom_call.1} parent=1 // pred_check_branch
      %34 = sbr.rel (0) target = $region29
    $region28: #{tpu_custom_call.1} parent=1 // pred_region
      _
    $region29: #{tpu_custom_call.1} parent=1 // pred_fallthru
      _
    // Predicated region
    $region30: #{tpu_custom_call.1} parent=1 // pred_check
      _
    $region31: #{tpu_custom_call.1} parent=1 // pred_check_branch
      %36 = sbr.rel (0) target = $region33
    $region32: #{tpu_custom_call.1} parent=1 // pred_region
      _
    $region33: #{tpu_custom_call.1} parent=1 // pred_fallthru
      _
    // Predicated region
    $region34: #{tpu_custom_call.1} parent=1 // pred_check
      _
    $region35: #{tpu_custom_call.1} parent=1 // pred_check_branch
      %38 = sbr.rel (0) target = $region37
    $region36: #{tpu_custom_call.1} parent=1 // pred_region
      _
    $region37: #{tpu_custom_call.1} parent=1 // pred_fallthru
      _
    // Predicated region
    $region38: #{tpu_custom_call.1} parent=1 // pred_check
      _
    $region39: #{tpu_custom_call.1} parent=1 // pred_check_branch
      %40 = sbr.rel (0) target = $region41
    $region40: #{tpu_custom_call.1} parent=1 // pred_region
      _
    $region41: #{tpu_custom_call.1} parent=1 // pred_fallthru
      _
    // Predicated region
    $region42: #{tpu_custom_call.1} parent=1 // pred_check
      _
    $region43: #{tpu_custom_call.1} parent=1 // pred_check_branch
      %42 = sbr.rel (0) target = $region45
    $region44: #{tpu_custom_call.1} parent=1 // pred_region
      _
    $region45: #{tpu_custom_call.1} parent=1 // pred_fallthru
      _
    // Predicated region
    $region46: #{tpu_custom_call.1} parent=1 // pred_check
      _
    $region47: #{tpu_custom_call.1} parent=1 // pred_check_branch
      %44 = sbr.rel (0) target = $region49
    $region48: #{tpu_custom_call.1} parent=1 // pred_region
      _
    $region49: #{tpu_custom_call.1} parent=1 // pred_fallthru
      _
    // Predicated region
    $region50: #{tpu_custom_call.1} parent=1 // pred_check
      _
    $region51: #{tpu_custom_call.1} parent=1 // pred_check_branch
      %46 = sbr.rel (0) target = $region53
    $region52: #{tpu_custom_call.1} parent=1 // pred_region
      _
    $region53: #{tpu_custom_call.1} parent=1 // pred_fallthru
      _
    %v47 = vld [vmem:[%s0] sm:$0xff]
    %v48 = vld [vmem:[%s0 + $0x8] sm:$0xff]
    %v49 = vld [vmem:[%s0 + $0x10] sm:$0xff]
    %v50 = vld [vmem:[%s0 + $0x18] sm:$0xff]
    %v51 = vld [vmem:[%s0 + $0x20] sm:$0xff]
    %v52 = vld [vmem:[%s0 + $0x28] sm:$0xff]
    %v53 = vld [vmem:[%s0 + $0x30] sm:$0xff]
    %v54 = vld [vmem:[%s0 + $0x38] sm:$0xff]
    %v55 = vld [vmem:[%s1] sm:$0xff]
    %v56 = vld [vmem:[%s1 + $0x8] sm:$0xff]
    %v57 = vld [vmem:[%s1 + $0x10] sm:$0xff]
    %v58 = vld [vmem:[%s1 + $0x18] sm:$0xff]
    %v59 = vld [vmem:[%s1 + $0x20] sm:$0x1]
    %v60 = vld [vmem:[%s1 + $0x28] sm:$0x1]
    %v61 = vld [vmem:[%s1 + $0x30] sm:$0x1]
    %v62 = vld [vmem:[%s1 + $0x38] sm:$0x1]
    %v63 = vld [vmem:[%s2] sm:$0xff]
    %v64 = vld [vmem:[%s2 + $0x8] sm:$0xff]
    %v65 = vld [vmem:[%s2 + $0x10] sm:$0xff]
    %v66 = vld [vmem:[%s2 + $0x18] sm:$0xff]
    %v67 = vld [vmem:[%s2 + $0x20] sm:$0xff]
    %v68 = vld [vmem:[%s2 + $0x28] sm:$0xff]
    %v69 = vld [vmem:[%s2 + $0x30] sm:$0xff]
    %v70 = vld [vmem:[%s2 + $0x38] sm:$0xff]
    %v71 = vld [vmem:[%s2 + $0x40] sm:$0xff]
    %vm72 = vcmask 130048
    %v74 = vsel %vm72, %v63, 0
    %v77 = vsel %vm72, %v64, 0
    %v80 = vsel %vm72, %v65, 0
    %v83 = vsel %vm72, %v66, 0
    %v86 = vsel %vm72, %v67, 0
    %v89 = vsel %vm72, %v68, 0
    %v92 = vsel %vm72, %v69, 0
    %v95 = vsel %vm72, %v70, 0
    %v98 = vsel %vm72, %v71, 0
    %100 = vmatprep.subr.mxu0 0.0
    %101 = vmatpush1.msra.mxu0 0.0
    %102 = vmatprep.subr.mxu0 0.0
    %103 = vmatpush1.msra.mxu0 0.0
    %104 = vmatprep.subr.mxu0 0.0
    %105 = vmatpush1.msra.mxu0 0.0
    %106 = vmatprep.subr.mxu0 0.0
    %107 = vmatpush1.msra.mxu0 0.0
    %108 = vmatprep.subr.mxu0 0.0
    %109 = vmatpush1.msra.mxu0 0.0
    %110 = vmatprep.subr.mxu0 0.0
    %111 = vmatpush1.msra.mxu0 0.0
    %112 = vmatprep.subr.mxu0 0.0
    %113 = vmatpush1.msra.mxu0 0.0
    %114 = vmatprep.subr.mxu0 0.0
    %115 = vmatpush1.msra.mxu0 0.0
    %116 = vmatprep.subr.mxu0 0.0
    %117 = vmatpush1.msra.mxu0 0.0
    %118 = vmatprep.subr.mxu0 0.0
    %119 = vmatpush1.msra.mxu0 0.0
    %120 = vmatprep.subr.mxu0 0.0
    %121 = vmatpush1.msra.mxu0 0.0
    %122 = vmatprep.subr.mxu0 0.0
    %123 = vmatpush1.msra.mxu0 0.0
    %124 = vmatprep.subr.mxu0 0.0
    %125 = vmatpush1.msra.mxu0 0.0
    %126 = vmatprep.subr.mxu0 0.0
    %127 = vmatpush1.msra.mxu0 0.0
    %128 = vmatprep.subr.mxu0 %v52
    %129 = vmatpush1.msra.mxu0 %v51
    %130 = vmatprep.subr.mxu0 %v48
    %131 = vmatpush1.msra.mxu0 %v47
    %132 = vmatprep.subr.mxu0 0.0
    %133 = vmatpush2.msra.mxu0 0.0
    %134 = vmatprep.subr.mxu0 0.0
    %135 = vmatpush2.msra.mxu0 0.0
    %136 = vmatprep.subr.mxu0 0.0
    %137 = vmatpush2.msra.mxu0 0.0
    %138 = vmatprep.subr.mxu0 0.0
    %139 = vmatpush2.msra.mxu0 0.0
    %140 = vmatprep.subr.mxu0 0.0
    %141 = vmatpush2.msra.mxu0 0.0
    %142 = vmatprep.subr.mxu0 0.0
    %143 = vmatpush2.msra.mxu0 0.0
    %144 = vmatprep.subr.mxu0 0.0
    %145 = vmatpush2.msra.mxu0 0.0
    %146 = vmatprep.subr.mxu0 0.0
    %147 = vmatpush2.msra.mxu0 0.0
    %148 = vmatprep.subr.mxu0 0.0
    %149 = vmatpush2.msra.mxu0 0.0
    %150 = vmatprep.subr.mxu0 0.0
    %151 = vmatpush2.msra.mxu0 0.0
    %152 = vmatprep.subr.mxu0 0.0
    %153 = vmatpush2.msra.mxu0 0.0
    %154 = vmatprep.subr.mxu0 0.0
    %155 = vmatpush2.msra.mxu0 0.0
    %156 = vmatprep.subr.mxu0 0.0
    %157 = vmatpush2.msra.mxu0 0.0
    %158 = vmatprep.subr.mxu0 0.0
    %159 = vmatpush2.msra.mxu0 0.0
    %160 = vmatprep.subr.mxu0 0.0
    %161 = vmatpush2.msra.mxu0 0.0
    %162 = vmatprep.subr.mxu0 0.0
    %163 = vmatpush2.msra.mxu0 0.0
    %164 = vmatprep.mubr.f32.mxu0 0.0
    %165 = vmatmul.mubr.f32.gmra.mxu0 %v74
    %v166 = vpop.f32.mrf.mxu0
    %v167 = vadd.f32 0.0, %v166
    %v168 = vpop.f32.mrf.mxu0
    %v169 = vadd.f32 0.0, %v168
    %170 = vmatprep.mubr.f32.mxu0 0.0
    %171 = vmatmul.mubr.f32.gmra.mxu0 %v77
    %v172 = vpop.f32.mrf.mxu0
    %v173 = vadd.f32 0.0, %v172
    %v174 = vpop.f32.mrf.mxu0
    %v175 = vadd.f32 0.0, %v174
    %176 = vmatprep.mubr.f32.mxu0 0.0
    %177 = vmatmul.mubr.f32.gmra.mxu0 %v80
    %v178 = vpop.f32.mrf.mxu0
    %v179 = vadd.f32 0.0, %v178
    %v180 = vpop.f32.mrf.mxu0
    %v181 = vadd.f32 0.0, %v180
    %182 = vmatprep.mubr.f32.mxu0 0.0
    %183 = vmatmul.mubr.f32.gmra.mxu0 %v83
    %v184 = vpop.f32.mrf.mxu0
    %v185 = vadd.f32 0.0, %v184
    %v186 = vpop.f32.mrf.mxu0
    %v187 = vadd.f32 0.0, %v186
    %188 = vmatprep.mubr.f32.mxu0 0.0
    %189 = vmatmul.mubr.f32.gmra.mxu0 %v86
    %v190 = vpop.f32.mrf.mxu0
    %v191 = vadd.f32 0.0, %v190
    %v192 = vpop.f32.mrf.mxu0
    %v193 = vadd.f32 0.0, %v192
    %194 = vmatprep.mubr.f32.mxu0 0.0
    %195 = vmatmul.mubr.f32.gmra.mxu0 %v89
    %v196 = vpop.f32.mrf.mxu0
    %v197 = vadd.f32 0.0, %v196
    %v198 = vpop.f32.mrf.mxu0
    %v199 = vadd.f32 0.0, %v198
    %200 = vmatprep.mubr.f32.mxu0 0.0
    %201 = vmatmul.mubr.f32.gmra.mxu0 %v92
    %v202 = vpop.f32.mrf.mxu0
    %v203 = vadd.f32 0.0, %v202
    %v204 = vpop.f32.mrf.mxu0
    %v205 = vadd.f32 0.0, %v204
    %206 = vmatprep.mubr.f32.mxu0 0.0
    %207 = vmatmul.mubr.f32.gmra.mxu0 %v95
    %v208 = vpop.f32.mrf.mxu0
    %v209 = vadd.f32 0.0, %v208
    %v210 = vpop.f32.mrf.mxu0
    %v211 = vadd.f32 0.0, %v210
    %212 = vmatprep.mubr.f32.mxu0 0.0
    %213 = vmatmul.mubr.f32.gmra.mxu0 %v98
    %v214 = vpop.f32.mrf.mxu0
    %v215 = vadd.f32 0.0, %v214
    %v216 = vpop.f32.mrf.mxu0
    %v217 = vadd.f32 0.0, %v216
    %218 = vdwg.mxu0
    %219 = vmatprep.subr.mxu0 0.0
    %220 = vmatpush1.msra.mxu0 0.0
    %221 = vmatprep.subr.mxu0 0.0
    %222 = vmatpush1.msra.mxu0 0.0
    %223 = vmatprep.subr.mxu0 0.0
    %224 = vmatpush1.msra.mxu0 0.0
    %225 = vmatprep.subr.mxu0 0.0
    %226 = vmatpush1.msra.mxu0 0.0
    %227 = vmatprep.subr.mxu0 0.0
    %228 = vmatpush1.msra.mxu0 0.0
    %229 = vmatprep.subr.mxu0 0.0
    %230 = vmatpush1.msra.mxu0 0.0
    %231 = vmatprep.subr.mxu0 0.0
    %232 = vmatpush1.msra.mxu0 0.0
    %233 = vmatprep.subr.mxu0 0.0
    %234 = vmatpush1.msra.mxu0 0.0
    %235 = vmatprep.subr.mxu0 0.0
    %236 = vmatpush1.msra.mxu0 0.0
    %237 = vmatprep.subr.mxu0 0.0
    %238 = vmatpush1.msra.mxu0 0.0
    %239 = vmatprep.subr.mxu0 0.0
    %240 = vmatpush1.msra.mxu0 0.0
    %241 = vmatprep.subr.mxu0 0.0
    %242 = vmatpush1.msra.mxu0 0.0
    %243 = vmatprep.subr.mxu0 0.0
    %244 = vmatpush1.msra.mxu0 0.0
    %245 = vmatprep.subr.mxu0 0.0
    %246 = vmatpush1.msra.mxu0 0.0
    %247 = vmatprep.subr.mxu0 %v54
    %248 = vmatpush1.msra.mxu0 %v53
    %249 = vmatprep.subr.mxu0 %v50
    %250 = vmatpush1.msra.mxu0 %v49
    %251 = vmatprep.subr.mxu0 0.0
    %252 = vmatpush2.msra.mxu0 0.0
    %253 = vmatprep.subr.mxu0 0.0
    %254 = vmatpush2.msra.mxu0 0.0
    %255 = vmatprep.subr.mxu0 0.0
    %256 = vmatpush2.msra.mxu0 0.0
    %257 = vmatprep.subr.mxu0 0.0
    %258 = vmatpush2.msra.mxu0 0.0
    %259 = vmatprep.subr.mxu0 0.0
    %260 = vmatpush2.msra.mxu0 0.0
    %261 = vmatprep.subr.mxu0 0.0
    %262 = vmatpush2.msra.mxu0 0.0
    %263 = vmatprep.subr.mxu0 0.0
    %264 = vmatpush2.msra.mxu0 0.0
    %265 = vmatprep.subr.mxu0 0.0
    %266 = vmatpush2.msra.mxu0 0.0
    %267 = vmatprep.subr.mxu0 0.0
    %268 = vmatpush2.msra.mxu0 0.0
    %269 = vmatprep.subr.mxu0 0.0
    %270 = vmatpush2.msra.mxu0 0.0
    %271 = vmatprep.subr.mxu0 0.0
    %272 = vmatpush2.msra.mxu0 0.0
    %273 = vmatprep.subr.mxu0 0.0
    %274 = vmatpush2.msra.mxu0 0.0
    %275 = vmatprep.subr.mxu0 0.0
    %276 = vmatpush2.msra.mxu0 0.0
    %277 = vmatprep.subr.mxu0 0.0
    %278 = vmatpush2.msra.mxu0 0.0
    %279 = vmatprep.subr.mxu0 0.0
    %280 = vmatpush2.msra.mxu0 0.0
    %281 = vmatprep.subr.mxu0 0.0
    %282 = vmatpush2.msra.mxu0 0.0
    %283 = vmatprep.mubr.f32.mxu0 0.0
    %284 = vmatmul.mubr.f32.gmra.mxu0 %v74
    %v285 = vpop.f32.mrf.mxu0
    %v286 = vadd.f32 0.0, %v285
    %v287 = vpop.f32.mrf.mxu0
    %v288 = vadd.f32 0.0, %v287
    %289 = vmatprep.mubr.f32.mxu0 0.0
    %290 = vmatmul.mubr.f32.gmra.mxu0 %v77
    %v291 = vpop.f32.mrf.mxu0
    %v292 = vadd.f32 0.0, %v291
    %v293 = vpop.f32.mrf.mxu0
    %v294 = vadd.f32 0.0, %v293
    %295 = vmatprep.mubr.f32.mxu0 0.0
    %296 = vmatmul.mubr.f32.gmra.mxu0 %v80
    %v297 = vpop.f32.mrf.mxu0
    %v298 = vadd.f32 0.0, %v297
    %v299 = vpop.f32.mrf.mxu0
    %v300 = vadd.f32 0.0, %v299
    %301 = vmatprep.mubr.f32.mxu0 0.0
    %302 = vmatmul.mubr.f32.gmra.mxu0 %v83
    %v303 = vpop.f32.mrf.mxu0
    %v304 = vadd.f32 0.0, %v303
    %v305 = vpop.f32.mrf.mxu0
    %v306 = vadd.f32 0.0, %v305
    %307 = vmatprep.mubr.f32.mxu0 0.0
    %308 = vmatmul.mubr.f32.gmra.mxu0 %v86
    %v309 = vpop.f32.mrf.mxu0
    %v310 = vadd.f32 0.0, %v309
    %v311 = vpop.f32.mrf.mxu0
    %v312 = vadd.f32 0.0, %v311
    %313 = vmatprep.mubr.f32.mxu0 0.0
    %314 = vmatmul.mubr.f32.gmra.mxu0 %v89
    %v315 = vpop.f32.mrf.mxu0
    %v316 = vadd.f32 0.0, %v315
    %v317 = vpop.f32.mrf.mxu0
    %v318 = vadd.f32 0.0, %v317
    %319 = vmatprep.mubr.f32.mxu0 0.0
    %320 = vmatmul.mubr.f32.gmra.mxu0 %v92
    %v321 = vpop.f32.mrf.mxu0
    %v322 = vadd.f32 0.0, %v321
    %v323 = vpop.f32.mrf.mxu0
    %v324 = vadd.f32 0.0, %v323
    %325 = vmatprep.mubr.f32.mxu0 0.0
    %326 = vmatmul.mubr.f32.gmra.mxu0 %v95
    %v327 = vpop.f32.mrf.mxu0
    %v328 = vadd.f32 0.0, %v327
    %v329 = vpop.f32.mrf.mxu0
    %v330 = vadd.f32 0.0, %v329
    %331 = vmatprep.mubr.f32.mxu0 0.0
    %332 = vmatmul.mubr.f32.gmra.mxu0 %v98
    %v333 = vpop.f32.mrf.mxu0
    %v334 = vadd.f32 0.0, %v333
    %v335 = vpop.f32.mrf.mxu0
    %v336 = vadd.f32 0.0, %v335
    %337 = vdwg.mxu0
    %338 = vrot.lane.b32.xlu0 %v167, 17
    %v339 = vpop.permute.xlu0 %338
    %340 = vrot.lane.b32.xlu0 %v169, 17
    %v341 = vpop.permute.xlu0 %340
    %342 = vrot.lane.b32.xlu0 %v286, 17
    %v343 = vpop.permute.xlu0 %342
    %344 = vrot.lane.b32.xlu0 %v288, 17
    %v345 = vpop.permute.xlu0 %344
    %v346 = vlaneseq
    %v347 = vand.u32 %v346, 127
    %vm348 = vcmp.lt.s32.totalorder %v347, 17
    %v349 = vsel %vm348, %v343, %v345
    %v350 = vsel %vm348, %v341, %v343
    %v351 = vsel %vm348, %v339, %v341
    %v352 = vsel %vm348, %v345, %v339
    %v353 = vlaneseq
    %v354 = vshrl.u32 %v353, 7
    %v355 = vsub.s32 0, %v354
    %v356 = vrot.slane %v55, %v355
    %v357 = vlaneseq
    %v358 = vshrl.u32 %v357, 7
    %v359 = vsub.s32 0, %v358
    %v360 = vrot.slane %v56, %v359
    %v361 = vlaneseq
    %v362 = vshrl.u32 %v361, 7
    %v363 = vsub.s32 0, %v362
    %v364 = vrot.slane %v57, %v363
    %v365 = vlaneseq
    %v366 = vshrl.u32 %v365, 7
    %v367 = vsub.s32 0, %v366
    %v368 = vrot.slane %v58, %v367
    %v369 = vmul.f32 %v352, %v356
    %v370 = vmul.f32 %v351, %v360
    %v371 = vmul.f32 %v350, %v364
    %v372 = vmul.f32 %v349, %v368
    %v373 = vadd.f32 %v369, 0.0
    %v374 = vadd.f32 %v370, 0.0
    %v375 = vadd.f32 %v371, 0.0
    %v376 = vadd.f32 %v372, 0.0
    %377 = vrot.lane.b32.xlu0 %v173, 16
    %v378 = vpop.permute.xlu0 %377
    %379 = vrot.lane.b32.xlu0 %v175, 16
    %v380 = vpop.permute.xlu0 %379
    %381 = vrot.lane.b32.xlu0 %v292, 16
    %v382 = vpop.permute.xlu0 %381
    %383 = vrot.lane.b32.xlu0 %v294, 16
    %v384 = vpop.permute.xlu0 %383
    %vm385 = vcmp.lt.s32.totalorder %v347, 16
    %v386 = vsel %vm385, %v382, %v384
    %v387 = vsel %vm385, %v380, %v382
    %v388 = vsel %vm385, %v378, %v380
    %v389 = vsel %vm385, %v384, %v378
    %v390 = vlaneseq
    %v391 = vshrl.u32 %v390, 7
    %v392 = vsub.s32 1, %v391
    %v393 = vrot.slane %v55, %v392
    %v394 = vlaneseq
    %v395 = vshrl.u32 %v394, 7
    %v396 = vsub.s32 1, %v395
    %v397 = vrot.slane %v56, %v396
    %v398 = vlaneseq
    %v399 = vshrl.u32 %v398, 7
    %v400 = vsub.s32 1, %v399
    %v401 = vrot.slane %v57, %v400
    %v402 = vlaneseq
    %v403 = vshrl.u32 %v402, 7
    %v404 = vsub.s32 1, %v403
    %v405 = vrot.slane %v58, %v404
    %v406 = vmul.f32 %v389, %v393
    %v407 = vmul.f32 %v388, %v397
    %v408 = vmul.f32 %v387, %v401
    %v409 = vmul.f32 %v386, %v405
    %v410 = vadd.f32 %v373, %v406
    %v411 = vadd.f32 %v374, %v407
    %v412 = vadd.f32 %v375, %v408
    %v413 = vadd.f32 %v376, %v409
    %414 = vrot.lane.b32.xlu0 %v179, 15
    %v415 = vpop.permute.xlu0 %414
    %416 = vrot.lane.b32.xlu0 %v181, 15
    %v417 = vpop.permute.xlu0 %416
    %418 = vrot.lane.b32.xlu0 %v298, 15
    %v419 = vpop.permute.xlu0 %418
    %420 = vrot.lane.b32.xlu0 %v300, 15
    %v421 = vpop.permute.xlu0 %420
    %vm422 = vcmp.lt.s32.totalorder %v347, 15
    %v423 = vsel %vm422, %v419, %v421
    %v424 = vsel %vm422, %v417, %v419
    %v425 = vsel %vm422, %v415, %v417
    %v426 = vsel %vm422, %v421, %v415
    %v427 = vlaneseq
    %v428 = vshrl.u32 %v427, 7
    %v429 = vsub.s32 2, %v428
    %v430 = vrot.slane %v55, %v429
    %v431 = vlaneseq
    %v432 = vshrl.u32 %v431, 7
    %v433 = vsub.s32 2, %v432
    %v434 = vrot.slane %v56, %v433
    %v435 = vlaneseq
    %v436 = vshrl.u32 %v435, 7
    %v437 = vsub.s32 2, %v436
    %v438 = vrot.slane %v57, %v437
    %v439 = vlaneseq
    %v440 = vshrl.u32 %v439, 7
    %v441 = vsub.s32 2, %v440
    %v442 = vrot.slane %v58, %v441
    %v443 = vmul.f32 %v426, %v430
    %v444 = vmul.f32 %v425, %v434
    %v445 = vmul.f32 %v424, %v438
    %v446 = vmul.f32 %v423, %v442
    %v447 = vadd.f32 %v410, %v443
    %v448 = vadd.f32 %v411, %v444
    %v449 = vadd.f32 %v412, %v445
    %v450 = vadd.f32 %v413, %v446
    %451 = vrot.lane.b32.xlu0 %v185, 1
    %v452 = vpop.permute.xlu0 %451
    %453 = vrot.lane.b32.xlu0 %v187, 1
    %v454 = vpop.permute.xlu0 %453
    %455 = vrot.lane.b32.xlu0 %v304, 1
    %v456 = vpop.permute.xlu0 %455
    %457 = vrot.lane.b32.xlu0 %v306, 1
    %v458 = vpop.permute.xlu0 %457
    %vm459 = vcmp.lt.s32.totalorder %v347, 1
    %v460 = vsel %vm459, %v456, %v458
    %v461 = vsel %vm459, %v454, %v456
    %v462 = vsel %vm459, %v452, %v454
    %v463 = vsel %vm459, %v458, %v452
    %v464 = vlaneseq
    %v465 = vshrl.u32 %v464, 7
    %v466 = vsub.s32 3, %v465
    %v467 = vrot.slane %v55, %v466
    %v468 = vlaneseq
    %v469 = vshrl.u32 %v468, 7
    %v470 = vsub.s32 3, %v469
    %v471 = vrot.slane %v56, %v470
    %v472 = vlaneseq
    %v473 = vshrl.u32 %v472, 7
    %v474 = vsub.s32 3, %v473
    %v475 = vrot.slane %v57, %v474
    %v476 = vlaneseq
    %v477 = vshrl.u32 %v476, 7
    %v478 = vsub.s32 3, %v477
    %v479 = vrot.slane %v58, %v478
    %v480 = vmul.f32 %v463, %v467
    %v481 = vmul.f32 %v462, %v471
    %v482 = vmul.f32 %v461, %v475
    %v483 = vmul.f32 %v460, %v479
    %v484 = vadd.f32 %v447, %v480
    %v485 = vadd.f32 %v448, %v481
    %v486 = vadd.f32 %v449, %v482
    %v487 = vadd.f32 %v450, %v483
    %v488 = vadd.f32 %v484, %v191
    %v489 = vadd.f32 %v485, %v193
    %v490 = vadd.f32 %v486, %v310
    %v491 = vadd.f32 %v487, %v312
    %492 = vrot.lane.b32.xlu0 %v197, 127
    %v493 = vpop.permute.xlu0 %492
    %494 = vrot.lane.b32.xlu0 %v199, 127
    %v495 = vpop.permute.xlu0 %494
    %496 = vrot.lane.b32.xlu0 %v316, 127
    %v497 = vpop.permute.xlu0 %496
    %498 = vrot.lane.b32.xlu0 %v318, 127
    %v499 = vpop.permute.xlu0 %498
    %vm500 = vcmp.lt.s32.totalorder %v347, 127
    %v501 = vsel %vm500, %v497, %v499
    %v502 = vsel %vm500, %v495, %v497
    %v503 = vsel %vm500, %v493, %v495
    %v504 = vsel %vm500, %v499, %v493
    %v505 = vlaneseq
    %v506 = vshrl.u32 %v505, 7
    %v507 = vsub.s32 5, %v506
    %v508 = vrot.slane %v55, %v507
    %v509 = vlaneseq
    %v510 = vshrl.u32 %v509, 7
    %v511 = vsub.s32 5, %v510
    %v512 = vrot.slane %v56, %v511
    %v513 = vlaneseq
    %v514 = vshrl.u32 %v513, 7
    %v515 = vsub.s32 5, %v514
    %v516 = vrot.slane %v57, %v515
    %v517 = vlaneseq
    %v518 = vshrl.u32 %v517, 7
    %v519 = vsub.s32 5, %v518
    %v520 = vrot.slane %v58, %v519
    %v521 = vmul.f32 %v503, %v508
    %v522 = vmul.f32 %v502, %v512
    %v523 = vmul.f32 %v501, %v516
    %v524 = vmul.f32 %v504, %v520
    %v525 = vadd.f32 %v488, %v521
    %v526 = vadd.f32 %v489, %v522
    %v527 = vadd.f32 %v490, %v523
    %v528 = vadd.f32 %v491, %v524
    %529 = vrot.lane.b32.xlu0 %v203, 113
    %v530 = vpop.permute.xlu0 %529
    %531 = vrot.lane.b32.xlu0 %v205, 113
    %v532 = vpop.permute.xlu0 %531
    %533 = vrot.lane.b32.xlu0 %v322, 113
    %v534 = vpop.permute.xlu0 %533
    %535 = vrot.lane.b32.xlu0 %v324, 113
    %v536 = vpop.permute.xlu0 %535
    %vm537 = vcmp.lt.s32.totalorder %v347, 113
    %v538 = vsel %vm537, %v534, %v536
    %v539 = vsel %vm537, %v532, %v534
    %v540 = vsel %vm537, %v530, %v532
    %v541 = vsel %vm537, %v536, %v530
    %v542 = vlaneseq
    %v543 = vshrl.u32 %v542, 7
    %v544 = vsub.s32 6, %v543
    %v545 = vrot.slane %v55, %v544
    %v546 = vlaneseq
    %v547 = vshrl.u32 %v546, 7
    %v548 = vsub.s32 6, %v547
    %v549 = vrot.slane %v56, %v548
    %v550 = vlaneseq
    %v551 = vshrl.u32 %v550, 7
    %v552 = vsub.s32 6, %v551
    %v553 = vrot.slane %v57, %v552
    %v554 = vlaneseq
    %v555 = vshrl.u32 %v554, 7
    %v556 = vsub.s32 6, %v555
    %v557 = vrot.slane %v58, %v556
    %v558 = vmul.f32 %v540, %v545
    %v559 = vmul.f32 %v539, %v549
    %v560 = vmul.f32 %v538, %v553
    %v561 = vmul.f32 %v541, %v557
    %v562 = vadd.f32 %v525, %v558
    %v563 = vadd.f32 %v526, %v559
    %v564 = vadd.f32 %v527, %v560
    %v565 = vadd.f32 %v528, %v561
    %566 = vrot.lane.b32.xlu0 %v209, 112
    %v567 = vpop.permute.xlu0 %566
    %568 = vrot.lane.b32.xlu0 %v211, 112
    %v569 = vpop.permute.xlu0 %568
    %570 = vrot.lane.b32.xlu0 %v328, 112
    %v571 = vpop.permute.xlu0 %570
    %572 = vrot.lane.b32.xlu0 %v330, 112
    %v573 = vpop.permute.xlu0 %572
    %vm574 = vcmp.lt.s32.totalorder %v347, 112
    %v575 = vsel %vm574, %v571, %v573
    %v576 = vsel %vm574, %v569, %v571
    %v577 = vsel %vm574, %v567, %v569
    %v578 = vsel %vm574, %v573, %v567
    %v579 = vlaneseq
    %v580 = vshrl.u32 %v579, 7
    %v581 = vsub.s32 7, %v580
    %v582 = vrot.slane %v55, %v581
    %v583 = vlaneseq
    %v584 = vshrl.u32 %v583, 7
    %v585 = vsub.s32 7, %v584
    %v586 = vrot.slane %v56, %v585
    %v587 = vlaneseq
    %v588 = vshrl.u32 %v587, 7
    %v589 = vsub.s32 7, %v588
    %v590 = vrot.slane %v57, %v589
    %v591 = vlaneseq
    %v592 = vshrl.u32 %v591, 7
    %v593 = vsub.s32 7, %v592
    %v594 = vrot.slane %v58, %v593
    %v595 = vmul.f32 %v577, %v582
    %v596 = vmul.f32 %v576, %v586
    %v597 = vmul.f32 %v575, %v590
    %v598 = vmul.f32 %v578, %v594
    %v599 = vadd.f32 %v562, %v595
    %v600 = vadd.f32 %v563, %v596
    %v601 = vadd.f32 %v564, %v597
    %v602 = vadd.f32 %v565, %v598
    %603 = vrot.lane.b32.xlu0 %v215, 111
    %v604 = vpop.permute.xlu0 %603
    %605 = vrot.lane.b32.xlu0 %v217, 111
    %v606 = vpop.permute.xlu0 %605
    %607 = vrot.lane.b32.xlu0 %v334, 111
    %v608 = vpop.permute.xlu0 %607
    %609 = vrot.lane.b32.xlu0 %v336, 111
    %v610 = vpop.permute.xlu0 %609
    %vm611 = vcmp.lt.s32.totalorder %v347, 111
    %v612 = vsel %vm611, %v608, %v610
    %v613 = vsel %vm611, %v606, %v608
    %v614 = vsel %vm611, %v604, %v606
    %v615 = vsel %vm611, %v610, %v604
    %v616 = vlaneseq
    %v617 = vshrl.u32 %v616, 7
    %v618 = vsub.s32 0, %v617
    %v619 = vrot.slane %v59, %v618
    %v620 = vlaneseq
    %v621 = vshrl.u32 %v620, 7
    %v622 = vsub.s32 0, %v621
    %v623 = vrot.slane %v60, %v622
    %v624 = vlaneseq
    %v625 = vshrl.u32 %v624, 7
    %v626 = vsub.s32 0, %v625
    %v627 = vrot.slane %v61, %v626
    %v628 = vlaneseq
    %v629 = vshrl.u32 %v628, 7
    %v630 = vsub.s32 0, %v629
    %v631 = vrot.slane %v62, %v630
    %v632 = vmul.f32 %v614, %v619
    %v633 = vmul.f32 %v613, %v623
    %v634 = vmul.f32 %v612, %v627
    %v635 = vmul.f32 %v615, %v631
    %v636 = vadd.f32 %v599, %v632
    %v637 = vadd.f32 %v600, %v633
    %v638 = vadd.f32 %v601, %v634
    %v639 = vadd.f32 %v602, %v635
    %v640 = vld [vmem:[%s3] sm:$0xff]
    %642 = vset.pattern.permute.xlu0 0
    %643 = vperm.xlu0 %642, %v640
    %v644 = vpop.permute.xlu0 %643
    %v646 = vadd.f32 %v636, %v644
    %v647 = vadd.f32 %v637, %v644
    %v648 = vadd.f32 %v638, %v644
    %v649 = vadd.f32 %v639, %v644
    %v650 = vld [vmem:[%s4] sm:$0xff]
    %v651 = vld [vmem:[%s4 + $0x8] sm:$0xff]
    %v652 = vld [vmem:[%s4 + $0x10] sm:$0xff]
    %v653 = vld [vmem:[%s4 + $0x18] sm:$0xff]
    %v654 = vld [vmem:[%s4 + $0x20] sm:$0xff]
    %v655 = vld [vmem:[%s4 + $0x28] sm:$0xff]
    %v656 = vld [vmem:[%s4 + $0x30] sm:$0xff]
    %v657 = vld [vmem:[%s4 + $0x38] sm:$0xff]
    %v658 = vld [vmem:[%s4 + $0x40] sm:$0xff]
    %vm659 = vcmask 64512
    %v661 = vsel %vm659, %v650, 0
    %v664 = vsel %vm659, %v651, 0
    %v667 = vsel %vm659, %v652, 0
    %v670 = vsel %vm659, %v653, 0
    %v673 = vsel %vm659, %v654, 0
    %v676 = vsel %vm659, %v655, 0
    %v679 = vsel %vm659, %v656, 0
    %v682 = vsel %vm659, %v657, 0
    %v685 = vsel %vm659, %v658, 0
    %687 = vmatprep.subr.mxu0 0.0
    %688 = vmatpush1.msra.mxu0 0.0
    %689 = vmatprep.subr.mxu0 0.0
    %690 = vmatpush1.msra.mxu0 0.0
    %691 = vmatprep.subr.mxu0 0.0
    %692 = vmatpush1.msra.mxu0 0.0
    %693 = vmatprep.subr.mxu0 0.0
    %694 = vmatpush1.msra.mxu0 0.0
    %695 = vmatprep.subr.mxu0 0.0
    %696 = vmatpush1.msra.mxu0 0.0
    %697 = vmatprep.subr.mxu0 0.0
    %698 = vmatpush1.msra.mxu0 0.0
    %699 = vmatprep.subr.mxu0 0.0
    %700 = vmatpush1.msra.mxu0 0.0
    %701 = vmatprep.subr.mxu0 0.0
    %702 = vmatpush1.msra.mxu0 0.0
    %703 = vmatprep.subr.mxu0 0.0
    %704 = vmatpush1.msra.mxu0 0.0
    %705 = vmatprep.subr.mxu0 0.0
    %706 = vmatpush1.msra.mxu0 0.0
    %707 = vmatprep.subr.mxu0 0.0
    %708 = vmatpush1.msra.mxu0 0.0
    %709 = vmatprep.subr.mxu0 0.0
    %710 = vmatpush1.msra.mxu0 0.0
    %711 = vmatprep.subr.mxu0 0.0
    %712 = vmatpush1.msra.mxu0 0.0
    %713 = vmatprep.subr.mxu0 0.0
    %714 = vmatpush1.msra.mxu0 0.0
    %715 = vmatprep.subr.mxu0 0.0
    %716 = vmatpush1.msra.mxu0 0.0
    %717 = vmatprep.subr.mxu0 %v647
    %718 = vmatpush1.msra.mxu0 %v646
    %719 = vmatprep.subr.mxu0 0.0
    %720 = vmatpush2.msra.mxu0 0.0
    %721 = vmatprep.subr.mxu0 0.0
    %722 = vmatpush2.msra.mxu0 0.0
    %723 = vmatprep.subr.mxu0 0.0
    %724 = vmatpush2.msra.mxu0 0.0
    %725 = vmatprep.subr.mxu0 0.0
    %726 = vmatpush2.msra.mxu0 0.0
    %727 = vmatprep.subr.mxu0 0.0
    %728 = vmatpush2.msra.mxu0 0.0
    %729 = vmatprep.subr.mxu0 0.0
    %730 = vmatpush2.msra.mxu0 0.0
    %731 = vmatprep.subr.mxu0 0.0
    %732 = vmatpush2.msra.mxu0 0.0
    %733 = vmatprep.subr.mxu0 0.0
    %734 = vmatpush2.msra.mxu0 0.0
    %735 = vmatprep.subr.mxu0 0.0
    %736 = vmatpush2.msra.mxu0 0.0
    %737 = vmatprep.subr.mxu0 0.0
    %738 = vmatpush2.msra.mxu0 0.0
    %739 = vmatprep.subr.mxu0 0.0
    %740 = vmatpush2.msra.mxu0 0.0
    %741 = vmatprep.subr.mxu0 0.0
    %742 = vmatpush2.msra.mxu0 0.0
    %743 = vmatprep.subr.mxu0 0.0
    %744 = vmatpush2.msra.mxu0 0.0
    %745 = vmatprep.subr.mxu0 0.0
    %746 = vmatpush2.msra.mxu0 0.0
    %747 = vmatprep.subr.mxu0 0.0
    %748 = vmatpush2.msra.mxu0 0.0
    %749 = vmatprep.subr.mxu0 0.0
    %750 = vmatpush2.msra.mxu0 0.0
    %751 = vmatprep.mubr.f32.mxu0 0.0
    %752 = vmatmul.mubr.f32.gmra.mxu0 %v661
    %v753 = vpop.f32.mrf.mxu0
    %v754 = vadd.f32 0.0, %v753
    %v755 = vpop.f32.mrf.mxu0
    %v756 = vadd.f32 0.0, %v755
    %757 = vmatprep.mubr.f32.mxu0 0.0
    %758 = vmatmul.mubr.f32.gmra.mxu0 %v664
    %v759 = vpop.f32.mrf.mxu0
    %v760 = vadd.f32 0.0, %v759
    %v761 = vpop.f32.mrf.mxu0
    %v762 = vadd.f32 0.0, %v761
    %763 = vmatprep.mubr.f32.mxu0 0.0
    %764 = vmatmul.mubr.f32.gmra.mxu0 %v667
    %v765 = vpop.f32.mrf.mxu0
    %v766 = vadd.f32 0.0, %v765
    %v767 = vpop.f32.mrf.mxu0
    %v768 = vadd.f32 0.0, %v767
    %769 = vmatprep.mubr.f32.mxu0 0.0
    %770 = vmatmul.mubr.f32.gmra.mxu0 %v670
    %v771 = vpop.f32.mrf.mxu0
    %v772 = vadd.f32 0.0, %v771
    %v773 = vpop.f32.mrf.mxu0
    %v774 = vadd.f32 0.0, %v773
    %775 = vmatprep.mubr.f32.mxu0 0.0
    %776 = vmatmul.mubr.f32.gmra.mxu0 %v673
    %v777 = vpop.f32.mrf.mxu0
    %v778 = vadd.f32 0.0, %v777
    %v779 = vpop.f32.mrf.mxu0
    %v780 = vadd.f32 0.0, %v779
    %781 = vmatprep.mubr.f32.mxu0 0.0
    %782 = vmatmul.mubr.f32.gmra.mxu0 %v676
    %v783 = vpop.f32.mrf.mxu0
    %v784 = vadd.f32 0.0, %v783
    %v785 = vpop.f32.mrf.mxu0
    %v786 = vadd.f32 0.0, %v785
    %787 = vmatprep.mubr.f32.mxu0 0.0
    %788 = vmatmul.mubr.f32.gmra.mxu0 %v679
    %v789 = vpop.f32.mrf.mxu0
    %v790 = vadd.f32 0.0, %v789
    %v791 = vpop.f32.mrf.mxu0
    %v792 = vadd.f32 0.0, %v791
    %793 = vmatprep.mubr.f32.mxu0 0.0
    %794 = vmatmul.mubr.f32.gmra.mxu0 %v682
    %v795 = vpop.f32.mrf.mxu0
    %v796 = vadd.f32 0.0, %v795
    %v797 = vpop.f32.mrf.mxu0
    %v798 = vadd.f32 0.0, %v797
    %799 = vmatprep.mubr.f32.mxu0 0.0
    %800 = vmatmul.mubr.f32.gmra.mxu0 %v685
    %v801 = vpop.f32.mrf.mxu0
    %v802 = vadd.f32 0.0, %v801
    %v803 = vpop.f32.mrf.mxu0
    %v804 = vadd.f32 0.0, %v803
    %805 = vdwg.mxu0
    %806 = vmatprep.subr.mxu0 0.0
    %807 = vmatpush1.msra.mxu0 0.0
    %808 = vmatprep.subr.mxu0 0.0
    %809 = vmatpush1.msra.mxu0 0.0
    %810 = vmatprep.subr.mxu0 0.0
    %811 = vmatpush1.msra.mxu0 0.0
    %812 = vmatprep.subr.mxu0 0.0
    %813 = vmatpush1.msra.mxu0 0.0
    %814 = vmatprep.subr.mxu0 0.0
    %815 = vmatpush1.msra.mxu0 0.0
    %816 = vmatprep.subr.mxu0 0.0
    %817 = vmatpush1.msra.mxu0 0.0
    %818 = vmatprep.subr.mxu0 0.0
    %819 = vmatpush1.msra.mxu0 0.0
    %820 = vmatprep.subr.mxu0 0.0
    %821 = vmatpush1.msra.mxu0 0.0
    %822 = vmatprep.subr.mxu0 0.0
    %823 = vmatpush1.msra.mxu0 0.0
    %824 = vmatprep.subr.mxu0 0.0
    %825 = vmatpush1.msra.mxu0 0.0
    %826 = vmatprep.subr.mxu0 0.0
    %827 = vmatpush1.msra.mxu0 0.0
    %828 = vmatprep.subr.mxu0 0.0
    %829 = vmatpush1.msra.mxu0 0.0
    %830 = vmatprep.subr.mxu0 0.0
    %831 = vmatpush1.msra.mxu0 0.0
    %832 = vmatprep.subr.mxu0 0.0
    %833 = vmatpush1.msra.mxu0 0.0
    %834 = vmatprep.subr.mxu0 0.0
    %835 = vmatpush1.msra.mxu0 0.0
    %836 = vmatprep.subr.mxu0 %v649
    %837 = vmatpush1.msra.mxu0 %v648
    %838 = vmatprep.subr.mxu0 0.0
    %839 = vmatpush2.msra.mxu0 0.0
    %840 = vmatprep.subr.mxu0 0.0
    %841 = vmatpush2.msra.mxu0 0.0
    %842 = vmatprep.subr.mxu0 0.0
    %843 = vmatpush2.msra.mxu0 0.0
    %844 = vmatprep.subr.mxu0 0.0
    %845 = vmatpush2.msra.mxu0 0.0
    %846 = vmatprep.subr.mxu0 0.0
    %847 = vmatpush2.msra.mxu0 0.0
    %848 = vmatprep.subr.mxu0 0.0
    %849 = vmatpush2.msra.mxu0 0.0
    %850 = vmatprep.subr.mxu0 0.0
    %851 = vmatpush2.msra.mxu0 0.0
    %852 = vmatprep.subr.mxu0 0.0
    %853 = vmatpush2.msra.mxu0 0.0
    %854 = vmatprep.subr.mxu0 0.0
    %855 = vmatpush2.msra.mxu0 0.0
    %856 = vmatprep.subr.mxu0 0.0
    %857 = vmatpush2.msra.mxu0 0.0
    %858 = vmatprep.subr.mxu0 0.0
    %859 = vmatpush2.msra.mxu0 0.0
    %860 = vmatprep.subr.mxu0 0.0
    %861 = vmatpush2.msra.mxu0 0.0
    %862 = vmatprep.subr.mxu0 0.0
    %863 = vmatpush2.msra.mxu0 0.0
    %864 = vmatprep.subr.mxu0 0.0
    %865 = vmatpush2.msra.mxu0 0.0
    %866 = vmatprep.subr.mxu0 0.0
    %867 = vmatpush2.msra.mxu0 0.0
    %868 = vmatprep.subr.mxu0 0.0
    %869 = vmatpush2.msra.mxu0 0.0
    %870 = vmatprep.mubr.f32.mxu0 0.0
    %871 = vmatmul.mubr.f32.gmra.mxu0 %v661
    %v872 = vpop.f32.mrf.mxu0
    %v873 = vadd.f32 0.0, %v872
    %v874 = vpop.f32.mrf.mxu0
    %v875 = vadd.f32 0.0, %v874
    %876 = vmatprep.mubr.f32.mxu0 0.0
    %877 = vmatmul.mubr.f32.gmra.mxu0 %v664
    %v878 = vpop.f32.mrf.mxu0
    %v879 = vadd.f32 0.0, %v878
    %v880 = vpop.f32.mrf.mxu0
    %v881 = vadd.f32 0.0, %v880
    %882 = vmatprep.mubr.f32.mxu0 0.0
    %883 = vmatmul.mubr.f32.gmra.mxu0 %v667
    %v884 = vpop.f32.mrf.mxu0
    %v885 = vadd.f32 0.0, %v884
    %v886 = vpop.f32.mrf.mxu0
    %v887 = vadd.f32 0.0, %v886
    %888 = vmatprep.mubr.f32.mxu0 0.0
    %889 = vmatmul.mubr.f32.gmra.mxu0 %v670
    %v890 = vpop.f32.mrf.mxu0
    %v891 = vadd.f32 0.0, %v890
    %v892 = vpop.f32.mrf.mxu0
    %v893 = vadd.f32 0.0, %v892
    %894 = vmatprep.mubr.f32.mxu0 0.0
    %895 = vmatmul.mubr.f32.gmra.mxu0 %v673
    %v896 = vpop.f32.mrf.mxu0
    %v897 = vadd.f32 0.0, %v896
    %v898 = vpop.f32.mrf.mxu0
    %v899 = vadd.f32 0.0, %v898
    %900 = vmatprep.mubr.f32.mxu0 0.0
    %901 = vmatmul.mubr.f32.gmra.mxu0 %v676
    %v902 = vpop.f32.mrf.mxu0
    %v903 = vadd.f32 0.0, %v902
    %v904 = vpop.f32.mrf.mxu0
    %v905 = vadd.f32 0.0, %v904
    %906 = vmatprep.mubr.f32.mxu0 0.0
    %907 = vmatmul.mubr.f32.gmra.mxu0 %v679
    %v908 = vpop.f32.mrf.mxu0
    %v909 = vadd.f32 0.0, %v908
    %v910 = vpop.f32.mrf.mxu0
    %v911 = vadd.f32 0.0, %v910
    %912 = vmatprep.mubr.f32.mxu0 0.0
    %913 = vmatmul.mubr.f32.gmra.mxu0 %v682
    %v914 = vpop.f32.mrf.mxu0
    %v915 = vadd.f32 0.0, %v914
    %v916 = vpop.f32.mrf.mxu0
    %v917 = vadd.f32 0.0, %v916
    %918 = vmatprep.mubr.f32.mxu0 0.0
    %919 = vmatmul.mubr.f32.gmra.mxu0 %v685
    %v920 = vpop.f32.mrf.mxu0
    %v921 = vadd.f32 0.0, %v920
    %v922 = vpop.f32.mrf.mxu0
    %v923 = vadd.f32 0.0, %v922
    %924 = vdwg.mxu0
    %925 = vrot.lane.b32.xlu0 %v754, 17
    %v926 = vpop.permute.xlu0 %925
    %927 = vrot.lane.b32.xlu0 %v756, 17
    %v928 = vpop.permute.xlu0 %927
    %929 = vrot.lane.b32.xlu0 %v873, 17
    %v930 = vpop.permute.xlu0 %929
    %931 = vrot.lane.b32.xlu0 %v875, 17
    %v932 = vpop.permute.xlu0 %931
    %v933 = vsel %vm348, %v930, %v932
    %v934 = vsel %vm348, %v928, %v930
    %v935 = vsel %vm348, %v926, %v928
    %v936 = vsel %vm348, %v932, %v926
    %v937 = vmul.f32 %v936, %v356
    %v938 = vmul.f32 %v935, %v360
    %v939 = vmul.f32 %v934, %v364
    %v940 = vmul.f32 %v933, %v368
    %v941 = vadd.f32 %v937, 0.0
    %v942 = vadd.f32 %v938, 0.0
    %v943 = vadd.f32 %v939, 0.0
    %v944 = vadd.f32 %v940, 0.0
    %945 = vrot.lane.b32.xlu0 %v760, 16
    %v946 = vpop.permute.xlu0 %945
    %947 = vrot.lane.b32.xlu0 %v762, 16
    %v948 = vpop.permute.xlu0 %947
    %949 = vrot.lane.b32.xlu0 %v879, 16
    %v950 = vpop.permute.xlu0 %949
    %951 = vrot.lane.b32.xlu0 %v881, 16
    %v952 = vpop.permute.xlu0 %951
    %v953 = vsel %vm385, %v950, %v952
    %v954 = vsel %vm385, %v948, %v950
    %v955 = vsel %vm385, %v946, %v948
    %v956 = vsel %vm385, %v952, %v946
    %v957 = vmul.f32 %v956, %v393
    %v958 = vmul.f32 %v955, %v397
    %v959 = vmul.f32 %v954, %v401
    %v960 = vmul.f32 %v953, %v405
    %v961 = vadd.f32 %v941, %v957
    %v962 = vadd.f32 %v942, %v958
    %v963 = vadd.f32 %v943, %v959
    %v964 = vadd.f32 %v944, %v960
    %965 = vrot.lane.b32.xlu0 %v766, 15
    %v966 = vpop.permute.xlu0 %965
    %967 = vrot.lane.b32.xlu0 %v768, 15
    %v968 = vpop.permute.xlu0 %967
    %969 = vrot.lane.b32.xlu0 %v885, 15
    %v970 = vpop.permute.xlu0 %969
    %971 = vrot.lane.b32.xlu0 %v887, 15
    %v972 = vpop.permute.xlu0 %971
    %v973 = vsel %vm422, %v970, %v972
    %v974 = vsel %vm422, %v968, %v970
    %v975 = vsel %vm422, %v966, %v968
    %v976 = vsel %vm422, %v972, %v966
    %v977 = vmul.f32 %v976, %v430
    %v978 = vmul.f32 %v975, %v434
    %v979 = vmul.f32 %v974, %v438
    %v980 = vmul.f32 %v973, %v442
    %v981 = vadd.f32 %v961, %v977
    %v982 = vadd.f32 %v962, %v978
    %v983 = vadd.f32 %v963, %v979
    %v984 = vadd.f32 %v964, %v980
    %985 = vrot.lane.b32.xlu0 %v772, 1
    %v986 = vpop.permute.xlu0 %985
    %987 = vrot.lane.b32.xlu0 %v774, 1
    %v988 = vpop.permute.xlu0 %987
    %989 = vrot.lane.b32.xlu0 %v891, 1
    %v990 = vpop.permute.xlu0 %989
    %991 = vrot.lane.b32.xlu0 %v893, 1
    %v992 = vpop.permute.xlu0 %991
    %v993 = vsel %vm459, %v990, %v992
    %v994 = vsel %vm459, %v988, %v990
    %v995 = vsel %vm459, %v986, %v988
    %v996 = vsel %vm459, %v992, %v986
    %v997 = vmul.f32 %v996, %v467
    %v998 = vmul.f32 %v995, %v471
    %v999 = vmul.f32 %v994, %v475
    %v1000 = vmul.f32 %v993, %v479
    %v1001 = vadd.f32 %v981, %v997
    %v1002 = vadd.f32 %v982, %v998
    %v1003 = vadd.f32 %v983, %v999
    %v1004 = vadd.f32 %v984, %v1000
    %v1005 = vadd.f32 %v1001, %v778
    %v1006 = vadd.f32 %v1002, %v780
    %v1007 = vadd.f32 %v1003, %v897
    %v1008 = vadd.f32 %v1004, %v899
    %1009 = vrot.lane.b32.xlu0 %v784, 127
    %v1010 = vpop.permute.xlu0 %1009
    %1011 = vrot.lane.b32.xlu0 %v786, 127
    %v1012 = vpop.permute.xlu0 %1011
    %1013 = vrot.lane.b32.xlu0 %v903, 127
    %v1014 = vpop.permute.xlu0 %1013
    %1015 = vrot.lane.b32.xlu0 %v905, 127
    %v1016 = vpop.permute.xlu0 %1015
    %v1017 = vsel %vm500, %v1014, %v1016
    %v1018 = vsel %vm500, %v1012, %v1014
    %v1019 = vsel %vm500, %v1010, %v1012
    %v1020 = vsel %vm500, %v1016, %v1010
    %v1021 = vmul.f32 %v1019, %v508
    %v1022 = vmul.f32 %v1018, %v512
    %v1023 = vmul.f32 %v1017, %v516
    %v1024 = vmul.f32 %v1020, %v520
    %v1025 = vadd.f32 %v1005, %v1021
    %v1026 = vadd.f32 %v1006, %v1022
    %v1027 = vadd.f32 %v1007, %v1023
    %v1028 = vadd.f32 %v1008, %v1024
    %1029 = vrot.lane.b32.xlu0 %v790, 113
    %v1030 = vpop.permute.xlu0 %1029
    %1031 = vrot.lane.b32.xlu0 %v792, 113
    %v1032 = vpop.permute.xlu0 %1031
    %1033 = vrot.lane.b32.xlu0 %v909, 113
    %v1034 = vpop.permute.xlu0 %1033
    %1035 = vrot.lane.b32.xlu0 %v911, 113
    %v1036 = vpop.permute.xlu0 %1035
    %v1037 = vsel %vm537, %v1034, %v1036
    %v1038 = vsel %vm537, %v1032, %v1034
    %v1039 = vsel %vm537, %v1030, %v1032
    %v1040 = vsel %vm537, %v1036, %v1030
    %v1041 = vmul.f32 %v1039, %v545
    %v1042 = vmul.f32 %v1038, %v549
    %v1043 = vmul.f32 %v1037, %v553
    %v1044 = vmul.f32 %v1040, %v557
    %v1045 = vadd.f32 %v1025, %v1041
    %v1046 = vadd.f32 %v1026, %v1042
    %v1047 = vadd.f32 %v1027, %v1043
    %v1048 = vadd.f32 %v1028, %v1044
    %1049 = vrot.lane.b32.xlu0 %v796, 112
    %v1050 = vpop.permute.xlu0 %1049
    %1051 = vrot.lane.b32.xlu0 %v798, 112
    %v1052 = vpop.permute.xlu0 %1051
    %1053 = vrot.lane.b32.xlu0 %v915, 112
    %v1054 = vpop.permute.xlu0 %1053
    %1055 = vrot.lane.b32.xlu0 %v917, 112
    %v1056 = vpop.permute.xlu0 %1055
    %v1057 = vsel %vm574, %v1054, %v1056
    %v1058 = vsel %vm574, %v1052, %v1054
    %v1059 = vsel %vm574, %v1050, %v1052
    %v1060 = vsel %vm574, %v1056, %v1050
    %v1061 = vmul.f32 %v1059, %v582
    %v1062 = vmul.f32 %v1058, %v586
    %v1063 = vmul.f32 %v1057, %v590
    %v1064 = vmul.f32 %v1060, %v594
    %v1065 = vadd.f32 %v1045, %v1061
    %v1066 = vadd.f32 %v1046, %v1062
    %v1067 = vadd.f32 %v1047, %v1063
    %v1068 = vadd.f32 %v1048, %v1064
    %1069 = vrot.lane.b32.xlu0 %v802, 111
    %v1070 = vpop.permute.xlu0 %1069
    %1071 = vrot.lane.b32.xlu0 %v804, 111
    %v1072 = vpop.permute.xlu0 %1071
    %1073 = vrot.lane.b32.xlu0 %v921, 111
    %v1074 = vpop.permute.xlu0 %1073
    %1075 = vrot.lane.b32.xlu0 %v923, 111
    %v1076 = vpop.permute.xlu0 %1075
    %v1077 = vsel %vm611, %v1074, %v1076
    %v1078 = vsel %vm611, %v1072, %v1074
    %v1079 = vsel %vm611, %v1070, %v1072
    %v1080 = vsel %vm611, %v1076, %v1070
    %v1081 = vmul.f32 %v1079, %v619
    %v1082 = vmul.f32 %v1078, %v623
    %v1083 = vmul.f32 %v1077, %v627
    %v1084 = vmul.f32 %v1080, %v631
    %v1085 = vadd.f32 %v1065, %v1081
    %v1086 = vadd.f32 %v1066, %v1082
    %v1087 = vadd.f32 %v1067, %v1083
    %v1088 = vadd.f32 %v1068, %v1084
    %v1089 = vld [vmem:[%s5] sm:$0xf]
    %1091 = vset.pattern.permute.xlu0 0
    %1092 = vperm.xlu0 %1091, %v1089
    %v1093 = vpop.permute.xlu0 %1092
    %v1095 = vadd.f32 %v1085, %v1093
    %v1096 = vadd.f32 %v1086, %v1093
    %v1097 = vadd.f32 %v1087, %v1093
    %v1098 = vadd.f32 %v1088, %v1093
    %v1099 = vmax.f32 %v1095, 0.0
    %v1100 = vmax.f32 %v1096, 0.0
    %v1101 = vmax.f32 %v1097, 0.0
    %v1102 = vmax.f32 %v1098, 0.0
    %v1103 = vld [vmem:[%s6] sm:$0xff]
    %v1104 = vld [vmem:[%s6 + $0x8] sm:$0xf]
    %v1105 = vld [vmem:[%s7] sm:$0xff]
    %v1106 = vld [vmem:[%s7 + $0x8] sm:$0xf]
    %1108 = vset.pattern.permute.xlu0 0
    %1109 = vperm.xlu0 %1108, %v1105
    %v1110 = vpop.permute.xlu0 %1109
    %1113 = vset.pattern.permute.xlu0 0
    %1114 = vperm.xlu0 %1113, %v1106
    %v1115 = vpop.permute.xlu0 %1114
    %vm1117 = vcmask 31744
    %v1119 = vsel %vm1117, %v1103, 0
    %v1122 = vsel %vm1117, %v1104, 0
    %vm1124 = vcmask 1043456
    %v1126 = vsel %vm1124, %v1099, 0
    %v1129 = vsel %vm1124, %v1100, 0
    %v1132 = vsel %vm1124, %v1101, 0
    %v1135 = vsel %vm1124, %v1102, 0
    %1137 = vmatprep.subr.mxu0 0.0
    %1138 = vmatpush1.msra.mxu0 0.0
    %1139 = vmatprep.subr.mxu0 0.0
    %1140 = vmatpush1.msra.mxu0 0.0
    %1141 = vmatprep.subr.mxu0 0.0
    %1142 = vmatpush1.msra.mxu0 0.0
    %1143 = vmatprep.subr.mxu0 0.0
    %1144 = vmatpush1.msra.mxu0 0.0
    %1145 = vmatprep.subr.mxu0 0.0
    %1146 = vmatpush1.msra.mxu0 0.0
    %1147 = vmatprep.subr.mxu0 0.0
    %1148 = vmatpush1.msra.mxu0 0.0
    %1149 = vmatprep.subr.mxu0 0.0
    %1150 = vmatpush1.msra.mxu0 0.0
    %1151 = vmatprep.subr.mxu0 0.0
    %1152 = vmatpush1.msra.mxu0 0.0
    %1153 = vmatprep.subr.mxu0 0.0
    %1154 = vmatpush1.msra.mxu0 0.0
    %1155 = vmatprep.subr.mxu0 0.0
    %1156 = vmatpush1.msra.mxu0 0.0
    %1157 = vmatprep.subr.mxu0 0.0
    %1158 = vmatpush1.msra.mxu0 0.0
    %1159 = vmatprep.subr.mxu0 0.0
    %1160 = vmatpush1.msra.mxu0 0.0
    %1161 = vmatprep.subr.mxu0 0.0
    %1162 = vmatpush1.msra.mxu0 0.0
    %1163 = vmatprep.subr.mxu0 0.0
    %1164 = vmatpush1.msra.mxu0 0.0
    %1165 = vmatprep.subr.mxu0 0.0
    %1166 = vmatpush1.msra.mxu0 0.0
    %1167 = vmatprep.subr.mxu0 %v1129
    %1168 = vmatpush1.msra.mxu0 %v1126
    %1169 = vmatprep.subr.mxu0 0.0
    %1170 = vmatpush2.msra.mxu0 0.0
    %1171 = vmatprep.subr.mxu0 0.0
    %1172 = vmatpush2.msra.mxu0 0.0
    %1173 = vmatprep.subr.mxu0 0.0
    %1174 = vmatpush2.msra.mxu0 0.0
    %1175 = vmatprep.subr.mxu0 0.0
    %1176 = vmatpush2.msra.mxu0 0.0
    %1177 = vmatprep.subr.mxu0 0.0
    %1178 = vmatpush2.msra.mxu0 0.0
    %1179 = vmatprep.subr.mxu0 0.0
    %1180 = vmatpush2.msra.mxu0 0.0
    %1181 = vmatprep.subr.mxu0 0.0
    %1182 = vmatpush2.msra.mxu0 0.0
    %1183 = vmatprep.subr.mxu0 0.0
    %1184 = vmatpush2.msra.mxu0 0.0
    %1185 = vmatprep.subr.mxu0 0.0
    %1186 = vmatpush2.msra.mxu0 0.0
    %1187 = vmatprep.subr.mxu0 0.0
    %1188 = vmatpush2.msra.mxu0 0.0
    %1189 = vmatprep.subr.mxu0 0.0
    %1190 = vmatpush2.msra.mxu0 0.0
    %1191 = vmatprep.subr.mxu0 0.0
    %1192 = vmatpush2.msra.mxu0 0.0
    %1193 = vmatprep.subr.mxu0 0.0
    %1194 = vmatpush2.msra.mxu0 0.0
    %1195 = vmatprep.subr.mxu0 0.0
    %1196 = vmatpush2.msra.mxu0 0.0
    %1197 = vmatprep.subr.mxu0 0.0
    %1198 = vmatpush2.msra.mxu0 0.0
    %1199 = vmatprep.subr.mxu0 0.0
    %1200 = vmatpush2.msra.mxu0 0.0
    %1201 = vmatprep.mubr.f32.mxu0 0.0
    %1202 = vmatmul.mubr.f32.gmra.mxu0 %v1119
    %v1203 = vpop.f32.mrf.mxu0
    %v1204 = vadd.f32 %v1110, %v1203
    %v1205 = vpop.f32.mrf.mxu0
    %v1206 = vadd.f32 %v1110, %v1205
    %1207 = vmatprep.mubr.f32.mxu0 0.0
    %1208 = vmatmul.mubr.f32.gmra.mxu0 %v1122
    %v1209 = vpop.f32.mrf.mxu0
    %v1210 = vadd.f32 %v1115, %v1209
    %v1211 = vpop.f32.mrf.mxu0
    %v1212 = vadd.f32 %v1115, %v1211
    %1213 = vdwg.mxu0
    %1214 = vmatprep.subr.mxu0 0.0
    %1215 = vmatpush1.msra.mxu0 0.0
    %1216 = vmatprep.subr.mxu0 0.0
    %1217 = vmatpush1.msra.mxu0 0.0
    %1218 = vmatprep.subr.mxu0 0.0
    %1219 = vmatpush1.msra.mxu0 0.0
    %1220 = vmatprep.subr.mxu0 0.0
    %1221 = vmatpush1.msra.mxu0 0.0
    %1222 = vmatprep.subr.mxu0 0.0
    %1223 = vmatpush1.msra.mxu0 0.0
    %1224 = vmatprep.subr.mxu0 0.0
    %1225 = vmatpush1.msra.mxu0 0.0
    %1226 = vmatprep.subr.mxu0 0.0
    %1227 = vmatpush1.msra.mxu0 0.0
    %1228 = vmatprep.subr.mxu0 0.0
    %1229 = vmatpush1.msra.mxu0 0.0
    %1230 = vmatprep.subr.mxu0 0.0
    %1231 = vmatpush1.msra.mxu0 0.0
    %1232 = vmatprep.subr.mxu0 0.0
    %1233 = vmatpush1.msra.mxu0 0.0
    %1234 = vmatprep.subr.mxu0 0.0
    %1235 = vmatpush1.msra.mxu0 0.0
    %1236 = vmatprep.subr.mxu0 0.0
    %1237 = vmatpush1.msra.mxu0 0.0
    %1238 = vmatprep.subr.mxu0 0.0
    %1239 = vmatpush1.msra.mxu0 0.0
    %1240 = vmatprep.subr.mxu0 0.0
    %1241 = vmatpush1.msra.mxu0 0.0
    %1242 = vmatprep.subr.mxu0 0.0
    %1243 = vmatpush1.msra.mxu0 0.0
    %1244 = vmatprep.subr.mxu0 %v1135
    %1245 = vmatpush1.msra.mxu0 %v1132
    %1246 = vmatprep.subr.mxu0 0.0
    %1247 = vmatpush2.msra.mxu0 0.0
    %1248 = vmatprep.subr.mxu0 0.0
    %1249 = vmatpush2.msra.mxu0 0.0
    %1250 = vmatprep.subr.mxu0 0.0
    %1251 = vmatpush2.msra.mxu0 0.0
    %1252 = vmatprep.subr.mxu0 0.0
    %1253 = vmatpush2.msra.mxu0 0.0
    %1254 = vmatprep.subr.mxu0 0.0
    %1255 = vmatpush2.msra.mxu0 0.0
    %1256 = vmatprep.subr.mxu0 0.0
    %1257 = vmatpush2.msra.mxu0 0.0
    %1258 = vmatprep.subr.mxu0 0.0
    %1259 = vmatpush2.msra.mxu0 0.0
    %1260 = vmatprep.subr.mxu0 0.0
    %1261 = vmatpush2.msra.mxu0 0.0
    %1262 = vmatprep.subr.mxu0 0.0
    %1263 = vmatpush2.msra.mxu0 0.0
    %1264 = vmatprep.subr.mxu0 0.0
    %1265 = vmatpush2.msra.mxu0 0.0
    %1266 = vmatprep.subr.mxu0 0.0
    %1267 = vmatpush2.msra.mxu0 0.0
    %1268 = vmatprep.subr.mxu0 0.0
    %1269 = vmatpush2.msra.mxu0 0.0
    %1270 = vmatprep.subr.mxu0 0.0
    %1271 = vmatpush2.msra.mxu0 0.0
    %1272 = vmatprep.subr.mxu0 0.0
    %1273 = vmatpush2.msra.mxu0 0.0
    %1274 = vmatprep.subr.mxu0 0.0
    %1275 = vmatpush2.msra.mxu0 0.0
    %1276 = vmatprep.subr.mxu0 0.0
    %1277 = vmatpush2.msra.mxu0 0.0
    %1278 = vmatprep.mubr.f32.mxu0 0.0
    %1279 = vmatmul.mubr.f32.gmra.mxu0 %v1119
    %v1280 = vpop.f32.mrf.mxu0
    %v1281 = vadd.f32 %v1110, %v1280
    %v1282 = vpop.f32.mrf.mxu0
    %v1283 = vadd.f32 %v1110, %v1282
    %1284 = vmatprep.mubr.f32.mxu0 0.0
    %1285 = vmatmul.mubr.f32.gmra.mxu0 %v1122
    %v1286 = vpop.f32.mrf.mxu0
    %v1287 = vadd.f32 %v1115, %v1286
    %v1288 = vpop.f32.mrf.mxu0
    %v1289 = vadd.f32 %v1115, %v1288
    %1290 = vdwg.mxu0
    %v1291 = vld [vmem:[%s9] sm:$0x7]
    %v1292 = vld [vmem:[%s10] sm:$0x7]
    %1294 = vset.pattern.permute.xlu0 0
    %1295 = vperm.xlu0 %1294, %v1292
    %v1296 = vpop.permute.xlu0 %1295
    %v1299 = vsel %vm1117, %v1291, 0
    %1301 = vmatprep.subr.mxu0 0.0
    %1302 = vmatpush1.msra.mxu0 0.0
    %1303 = vmatprep.subr.mxu0 0.0
    %1304 = vmatpush1.msra.mxu0 0.0
    %1305 = vmatprep.subr.mxu0 0.0
    %1306 = vmatpush1.msra.mxu0 0.0
    %1307 = vmatprep.subr.mxu0 0.0
    %1308 = vmatpush1.msra.mxu0 0.0
    %1309 = vmatprep.subr.mxu0 0.0
    %1310 = vmatpush1.msra.mxu0 0.0
    %1311 = vmatprep.subr.mxu0 0.0
    %1312 = vmatpush1.msra.mxu0 0.0
    %1313 = vmatprep.subr.mxu0 0.0
    %1314 = vmatpush1.msra.mxu0 0.0
    %1315 = vmatprep.subr.mxu0 0.0
    %1316 = vmatpush1.msra.mxu0 0.0
    %1317 = vmatprep.subr.mxu0 0.0
    %1318 = vmatpush1.msra.mxu0 0.0
    %1319 = vmatprep.subr.mxu0 0.0
    %1320 = vmatpush1.msra.mxu0 0.0
    %1321 = vmatprep.subr.mxu0 0.0
    %1322 = vmatpush1.msra.mxu0 0.0
    %1323 = vmatprep.subr.mxu0 0.0
    %1324 = vmatpush1.msra.mxu0 0.0
    %1325 = vmatprep.subr.mxu0 0.0
    %1326 = vmatpush1.msra.mxu0 0.0
    %1327 = vmatprep.subr.mxu0 0.0
    %1328 = vmatpush1.msra.mxu0 0.0
    %1329 = vmatprep.subr.mxu0 0.0
    %1330 = vmatpush1.msra.mxu0 0.0
    %1331 = vmatprep.subr.mxu0 %v1129
    %1332 = vmatpush1.msra.mxu0 %v1126
    %1333 = vmatprep.subr.mxu0 0.0
    %1334 = vmatpush2.msra.mxu0 0.0
    %1335 = vmatprep.subr.mxu0 0.0
    %1336 = vmatpush2.msra.mxu0 0.0
    %1337 = vmatprep.subr.mxu0 0.0
    %1338 = vmatpush2.msra.mxu0 0.0
    %1339 = vmatprep.subr.mxu0 0.0
    %1340 = vmatpush2.msra.mxu0 0.0
    %1341 = vmatprep.subr.mxu0 0.0
    %1342 = vmatpush2.msra.mxu0 0.0
    %1343 = vmatprep.subr.mxu0 0.0
    %1344 = vmatpush2.msra.mxu0 0.0
    %1345 = vmatprep.subr.mxu0 0.0
    %1346 = vmatpush2.msra.mxu0 0.0
    %1347 = vmatprep.subr.mxu0 0.0
    %1348 = vmatpush2.msra.mxu0 0.0
    %1349 = vmatprep.subr.mxu0 0.0
    %1350 = vmatpush2.msra.mxu0 0.0
    %1351 = vmatprep.subr.mxu0 0.0
    %1352 = vmatpush2.msra.mxu0 0.0
    %1353 = vmatprep.subr.mxu0 0.0
    %1354 = vmatpush2.msra.mxu0 0.0
    %1355 = vmatprep.subr.mxu0 0.0
    %1356 = vmatpush2.msra.mxu0 0.0
    %1357 = vmatprep.subr.mxu0 0.0
    %1358 = vmatpush2.msra.mxu0 0.0
    %1359 = vmatprep.subr.mxu0 0.0
    %1360 = vmatpush2.msra.mxu0 0.0
    %1361 = vmatprep.subr.mxu0 0.0
    %1362 = vmatpush2.msra.mxu0 0.0
    %1363 = vmatprep.subr.mxu0 0.0
    %1364 = vmatpush2.msra.mxu0 0.0
    %1365 = vmatprep.mubr.f32.mxu0 0.0
    %1366 = vmatmul.mubr.f32.gmra.mxu0 %v1299
    %v1367 = vpop.f32.mrf.mxu0
    %v1368 = vadd.f32 %v1296, %v1367
    %v1369 = vpop.f32.mrf.mxu0
    %v1370 = vadd.f32 %v1296, %v1369
    %1371 = vdwg.mxu0
    %1372 = vmatprep.subr.mxu0 0.0
    %1373 = vmatpush1.msra.mxu0 0.0
    %1374 = vmatprep.subr.mxu0 0.0
    %1375 = vmatpush1.msra.mxu0 0.0
    %1376 = vmatprep.subr.mxu0 0.0
    %1377 = vmatpush1.msra.mxu0 0.0
    %1378 = vmatprep.subr.mxu0 0.0
    %1379 = vmatpush1.msra.mxu0 0.0
    %1380 = vmatprep.subr.mxu0 0.0
    %1381 = vmatpush1.msra.mxu0 0.0
    %1382 = vmatprep.subr.mxu0 0.0
    %1383 = vmatpush1.msra.mxu0 0.0
    %1384 = vmatprep.subr.mxu0 0.0
    %1385 = vmatpush1.msra.mxu0 0.0
    %1386 = vmatprep.subr.mxu0 0.0
    %1387 = vmatpush1.msra.mxu0 0.0
    %1388 = vmatprep.subr.mxu0 0.0
    %1389 = vmatpush1.msra.mxu0 0.0
    %1390 = vmatprep.subr.mxu0 0.0
    %1391 = vmatpush1.msra.mxu0 0.0
    %1392 = vmatprep.subr.mxu0 0.0
    %1393 = vmatpush1.msra.mxu0 0.0
    %1394 = vmatprep.subr.mxu0 0.0
    %1395 = vmatpush1.msra.mxu0 0.0
    %1396 = vmatprep.subr.mxu0 0.0
    %1397 = vmatpush1.msra.mxu0 0.0
    %1398 = vmatprep.subr.mxu0 0.0
    %1399 = vmatpush1.msra.mxu0 0.0
    %1400 = vmatprep.subr.mxu0 0.0
    %1401 = vmatpush1.msra.mxu0 0.0
    %1402 = vmatprep.subr.mxu0 %v1135
    %1403 = vmatpush1.msra.mxu0 %v1132
    %1404 = vmatprep.subr.mxu0 0.0
    %1405 = vmatpush2.msra.mxu0 0.0
    %1406 = vmatprep.subr.mxu0 0.0
    %1407 = vmatpush2.msra.mxu0 0.0
    %1408 = vmatprep.subr.mxu0 0.0
    %1409 = vmatpush2.msra.mxu0 0.0
    %1410 = vmatprep.subr.mxu0 0.0
    %1411 = vmatpush2.msra.mxu0 0.0
    %1412 = vmatprep.subr.mxu0 0.0
    %1413 = vmatpush2.msra.mxu0 0.0
    %1414 = vmatprep.subr.mxu0 0.0
    %1415 = vmatpush2.msra.mxu0 0.0
    %1416 = vmatprep.subr.mxu0 0.0
    %1417 = vmatpush2.msra.mxu0 0.0
    %1418 = vmatprep.subr.mxu0 0.0
    %1419 = vmatpush2.msra.mxu0 0.0
    %1420 = vmatprep.subr.mxu0 0.0
    %1421 = vmatpush2.msra.mxu0 0.0
    %1422 = vmatprep.subr.mxu0 0.0
    %1423 = vmatpush2.msra.mxu0 0.0
    %1424 = vmatprep.subr.mxu0 0.0
    %1425 = vmatpush2.msra.mxu0 0.0
    %1426 = vmatprep.subr.mxu0 0.0
    %1427 = vmatpush2.msra.mxu0 0.0
    %1428 = vmatprep.subr.mxu0 0.0
    %1429 = vmatpush2.msra.mxu0 0.0
    %1430 = vmatprep.subr.mxu0 0.0
    %1431 = vmatpush2.msra.mxu0 0.0
    %1432 = vmatprep.subr.mxu0 0.0
    %1433 = vmatpush2.msra.mxu0 0.0
    %1434 = vmatprep.subr.mxu0 0.0
    %1435 = vmatpush2.msra.mxu0 0.0
    %1436 = vmatprep.mubr.f32.mxu0 0.0
    %1437 = vmatmul.mubr.f32.gmra.mxu0 %v1299
    %v1438 = vpop.f32.mrf.mxu0
    %v1439 = vadd.f32 %v1296, %v1438
    %v1440 = vpop.f32.mrf.mxu0
    %v1441 = vadd.f32 %v1296, %v1440
    %1442 = vdwg.mxu0
    %v1443 = vmax.f32 %v1204, %v1206
    %1444 = vmax.xlane.f32.xlu0 %v1443
    %v1445 = vpop.xlane.xlu0 %1444
    %v1446 = vsel %vm1124, %v1210, -inf
    %v1447 = vsel %vm1124, %v1212, -inf
    %v1448 = vmax.f32 %v1446, %v1447
    %1449 = vmax.xlane.f32.xlu0 %v1448
    %v1450 = vpop.xlane.xlu0 %1449
    %v1451 = vmax.f32 %v1281, %v1283
    %1452 = vmax.xlane.f32.xlu0 %v1451
    %v1453 = vpop.xlane.xlu0 %1452
    %v1454 = vsel %vm1124, %v1287, -inf
    %v1455 = vsel %vm1124, %v1289, -inf
    %v1456 = vmax.f32 %v1454, %v1455
    %1457 = vmax.xlane.f32.xlu0 %v1456
    %v1458 = vpop.xlane.xlu0 %1457
    %vm1459 = vcmask 7168
    %v1460 = vsel %vm1459, %v1445, %v1453
    %v1461 = vsel %vm1459, %v1450, %v1458
    %v1462 = vld [vmem:[%s8] sm:$0x7]
    %vm1463 = vcmask 97280
    %v1465 = vsel %vm1463, %v1462, 0
    %v1468 = vsel %vm1124, %v1461, 0
    %1470 = vmatprep.subr.mxu0 0.0
    %1471 = vmatpush1.msra.mxu0 0.0
    %1472 = vmatprep.subr.mxu0 0.0
    %1473 = vmatpush1.msra.mxu0 0.0
    %1474 = vmatprep.subr.mxu0 0.0
    %1475 = vmatpush1.msra.mxu0 0.0
    %1476 = vmatprep.subr.mxu0 0.0
    %1477 = vmatpush1.msra.mxu0 0.0
    %1478 = vmatprep.subr.mxu0 0.0
    %1479 = vmatpush1.msra.mxu0 0.0
    %1480 = vmatprep.subr.mxu0 0.0
    %1481 = vmatpush1.msra.mxu0 0.0
    %1482 = vmatprep.subr.mxu0 0.0
    %1483 = vmatpush1.msra.mxu0 0.0
    %1484 = vmatprep.subr.mxu0 0.0
    %1485 = vmatpush1.msra.mxu0 0.0
    %1486 = vmatprep.subr.mxu0 0.0
    %1487 = vmatpush1.msra.mxu0 0.0
    %1488 = vmatprep.subr.mxu0 0.0
    %1489 = vmatpush1.msra.mxu0 0.0
    %1490 = vmatprep.subr.mxu0 0.0
    %1491 = vmatpush1.msra.mxu0 0.0
    %1492 = vmatprep.subr.mxu0 0.0
    %1493 = vmatpush1.msra.mxu0 0.0
    %1494 = vmatprep.subr.mxu0 0.0
    %1495 = vmatpush1.msra.mxu0 0.0
    %1496 = vmatprep.subr.mxu0 0.0
    %1497 = vmatpush1.msra.mxu0 0.0
    %1498 = vmatprep.subr.mxu0 0.0
    %1499 = vmatpush1.msra.mxu0 %v1468
    %1500 = vmatprep.subr.mxu0 0.0
    %1501 = vmatpush1.msra.mxu0 %v1460
    %1502 = vmatprep.subr.mxu0 0.0
    %1503 = vmatpush2.msra.mxu0 0.0
    %1504 = vmatprep.subr.mxu0 0.0
    %1505 = vmatpush2.msra.mxu0 0.0
    %1506 = vmatprep.subr.mxu0 0.0
    %1507 = vmatpush2.msra.mxu0 0.0
    %1508 = vmatprep.subr.mxu0 0.0
    %1509 = vmatpush2.msra.mxu0 0.0
    %1510 = vmatprep.subr.mxu0 0.0
    %1511 = vmatpush2.msra.mxu0 0.0
    %1512 = vmatprep.subr.mxu0 0.0
    %1513 = vmatpush2.msra.mxu0 0.0
    %1514 = vmatprep.subr.mxu0 0.0
    %1515 = vmatpush2.msra.mxu0 0.0
    %1516 = vmatprep.subr.mxu0 0.0
    %1517 = vmatpush2.msra.mxu0 0.0
    %1518 = vmatprep.subr.mxu0 0.0
    %1519 = vmatpush2.msra.mxu0 0.0
    %1520 = vmatprep.subr.mxu0 0.0
    %1521 = vmatpush2.msra.mxu0 0.0
    %1522 = vmatprep.subr.mxu0 0.0
    %1523 = vmatpush2.msra.mxu0 0.0
    %1524 = vmatprep.subr.mxu0 0.0
    %1525 = vmatpush2.msra.mxu0 0.0
    %1526 = vmatprep.subr.mxu0 0.0
    %1527 = vmatpush2.msra.mxu0 0.0
    %1528 = vmatprep.subr.mxu0 0.0
    %1529 = vmatpush2.msra.mxu0 0.0
    %1530 = vmatprep.subr.mxu0 0.0
    %1531 = vmatpush2.msra.mxu0 0.0
    %1532 = vmatprep.subr.mxu0 0.0
    %1533 = vmatpush2.msra.mxu0 0.0
    %1534 = vmatprep.mubr.f32.mxu0 0.0
    %1535 = vmatmul.mubr.f32.gmra.mxu0 %v1465
    %v1536 = vpop.f32.mrf.mxu0
    %v1537 = vadd.f32 0.0, %v1536
    %v1538 = vpop.f32.mrf.mxu0
    %1539 = vdwg.mxu0
    %vm1540 = vcmask 10240
    %v1541 = vsel %vm1540, %v1537, -inf
    %v1542 = vrot.slane %v1541, 4
    %v1543 = vmax.f32 %v1541, %v1542
    %v1544 = vrot.slane %v1543, 2
    %v1545 = vmax.f32 %v1543, %v1544
    %v1546 = vrot.slane %v1545, 1
    %v1547 = vmax.f32 %v1545, %v1546
    %v1548 = vsub.f32 %v1537, %v1547
    %v1549 = vmul.f32 %v1548, 1.442695
    %v1550 = vpow.pop %v1549
    %v1551 = vsel %vm1540, %v1550, 0.0
    %v1552 = vrot.slane %v1551, 4
    %v1553 = vadd.f32 %v1551, %v1552
    %v1554 = vrot.slane %v1553, 2
    %v1555 = vadd.f32 %v1553, %v1554
    %v1556 = vrot.slane %v1555, 1
    %v1557 = vadd.f32 %v1555, %v1556
    %v1558 = vrcp.pop %v1557
    %v1559 = vmul.f32 %v1550, %v1558
    %1561 = vset.pattern.permute.xlu0 0
    %1562 = vperm.xlu0 %1561, %v1559
    %v1563 = vpop.permute.xlu0 %1562
    %v1565 = vmul.f32 %v1368, %v1563
    %v1566 = vmul.f32 %v1370, %v1563
    %vm1567 = vcmask 1042432
    %v1568 = vsel %vm1567, %v1565, 0.0
    %v1569 = vrot.slane %v1568, 4
    %v1570 = vadd.f32 %v1568, %v1569
    %v1571 = vrot.slane %v1570, 2
    %v1572 = vadd.f32 %v1570, %v1571
    %v1573 = vrot.slane %v1572, 1
    %v1574 = vadd.f32 %v1572, %v1573
    %v1575 = vsel %vm1567, %v1566, 0.0
    %v1576 = vrot.slane %v1575, 4
    %v1577 = vadd.f32 %v1575, %v1576
    %v1578 = vrot.slane %v1577, 2
    %v1579 = vadd.f32 %v1577, %v1578
    %v1580 = vrot.slane %v1579, 1
    %v1581 = vadd.f32 %v1579, %v1580
    %v1582 = vsel %vm1124, %v1099, 0.0
    %v1583 = vsel %vm1124, %v1100, 0.0
    %v1584 = vadd.f32 %v1582, %v1583
    %1585 = vadd.xlane.f32.xlu0 %v1584
    %v1586 = vpop.xlane.xlu0 %1585
    %v1587 = vmul.f32 %v1099, %v1574
    %v1588 = vmul.f32 %v1100, %v1581
    %v1589 = vsel %vm1124, %v1587, 0.0
    %v1590 = vsel %vm1124, %v1588, 0.0
    %v1591 = vadd.f32 %v1589, %v1590
    %1592 = vadd.xlane.f32.xlu0 %v1591
    %v1593 = vpop.xlane.xlu0 %1592
    %v1595 = vrot.slane %v1593, 4
    %v1597 = vsel %vm1124, %v1586, %v1595
    %v1598 = vmul.f32 %v1597, 0.00390625
    %1599 = vset.pattern.permute.xlu0 1
    %1600 = vperm.xlu0 %1599, %v1559
    %v1601 = vpop.permute.xlu0 %1600
    %v1603 = vmul.f32 %v1439, %v1601
    %v1604 = vmul.f32 %v1441, %v1601
    %v1605 = vsel %vm1567, %v1603, 0.0
    %v1606 = vrot.slane %v1605, 4
    %v1607 = vadd.f32 %v1605, %v1606
    %v1608 = vrot.slane %v1607, 2
    %v1609 = vadd.f32 %v1607, %v1608
    %v1610 = vrot.slane %v1609, 1
    %v1611 = vadd.f32 %v1609, %v1610
    %v1612 = vsel %vm1567, %v1604, 0.0
    %v1613 = vrot.slane %v1612, 4
    %v1614 = vadd.f32 %v1612, %v1613
    %v1615 = vrot.slane %v1614, 2
    %v1616 = vadd.f32 %v1614, %v1615
    %v1617 = vrot.slane %v1616, 1
    %v1618 = vadd.f32 %v1616, %v1617
    %v1619 = vsel %vm1124, %v1101, 0.0
    %v1620 = vsel %vm1124, %v1102, 0.0
    %v1621 = vadd.f32 %v1619, %v1620
    %1622 = vadd.xlane.f32.xlu0 %v1621
    %v1623 = vpop.xlane.xlu0 %1622
    %v1624 = vmul.f32 %v1101, %v1611
    %v1625 = vmul.f32 %v1102, %v1618
    %v1626 = vsel %vm1124, %v1624, 0.0
    %v1627 = vsel %vm1124, %v1625, 0.0
    %v1628 = vadd.f32 %v1626, %v1627
    %1629 = vadd.xlane.f32.xlu0 %v1628
    %v1630 = vpop.xlane.xlu0 %1629
    %v1632 = vrot.slane %v1630, 4
    %v1634 = vsel %vm1124, %v1623, %v1632
    %v1635 = vmul.f32 %v1634, 0.00390625
    %1637 = vrot.lane.b32.xlu0 %v1635, 1
    %v1638 = vpop.permute.xlu0 %1637
    %v1640 = vsel %vm1459, %v1598, %v1638
    %v1641 = vld [vmem:[%s11] sm:$0x7]
    %v1642 = vld [vmem:[%s12] sm:$0x7]
    %1644 = vset.pattern.permute.xlu0 0
    %1645 = vperm.xlu0 %1644, %v1642
    %v1646 = vpop.permute.xlu0 %1645
    %v1649 = vsel %vm659, %v1641, 0
    %1651 = vmatprep.subr.mxu0 0.0
    %1652 = vmatpush1.msra.mxu0 0.0
    %1653 = vmatprep.subr.mxu0 0.0
    %1654 = vmatpush1.msra.mxu0 0.0
    %1655 = vmatprep.subr.mxu0 0.0
    %1656 = vmatpush1.msra.mxu0 0.0
    %1657 = vmatprep.subr.mxu0 0.0
    %1658 = vmatpush1.msra.mxu0 0.0
    %1659 = vmatprep.subr.mxu0 0.0
    %1660 = vmatpush1.msra.mxu0 0.0
    %1661 = vmatprep.subr.mxu0 0.0
    %1662 = vmatpush1.msra.mxu0 0.0
    %1663 = vmatprep.subr.mxu0 0.0
    %1664 = vmatpush1.msra.mxu0 0.0
    %1665 = vmatprep.subr.mxu0 0.0
    %1666 = vmatpush1.msra.mxu0 0.0
    %1667 = vmatprep.subr.mxu0 0.0
    %1668 = vmatpush1.msra.mxu0 0.0
    %1669 = vmatprep.subr.mxu0 0.0
    %1670 = vmatpush1.msra.mxu0 0.0
    %1671 = vmatprep.subr.mxu0 0.0
    %1672 = vmatpush1.msra.mxu0 0.0
    %1673 = vmatprep.subr.mxu0 0.0
    %1674 = vmatpush1.msra.mxu0 0.0
    %1675 = vmatprep.subr.mxu0 0.0
    %1676 = vmatpush1.msra.mxu0 0.0
    %1677 = vmatprep.subr.mxu0 0.0
    %1678 = vmatpush1.msra.mxu0 0.0
    %1679 = vmatprep.subr.mxu0 0.0
    %1680 = vmatpush1.msra.mxu0 0.0
    %1681 = vmatprep.subr.mxu0 0.0
    %1682 = vmatpush1.msra.mxu0 %v1640
    %1683 = vmatprep.subr.mxu0 0.0
    %1684 = vmatpush2.msra.mxu0 0.0
    %1685 = vmatprep.subr.mxu0 0.0
    %1686 = vmatpush2.msra.mxu0 0.0
    %1687 = vmatprep.subr.mxu0 0.0
    %1688 = vmatpush2.msra.mxu0 0.0
    %1689 = vmatprep.subr.mxu0 0.0
    %1690 = vmatpush2.msra.mxu0 0.0
    %1691 = vmatprep.subr.mxu0 0.0
    %1692 = vmatpush2.msra.mxu0 0.0
    %1693 = vmatprep.subr.mxu0 0.0
    %1694 = vmatpush2.msra.mxu0 0.0
    %1695 = vmatprep.subr.mxu0 0.0
    %1696 = vmatpush2.msra.mxu0 0.0
    %1697 = vmatprep.subr.mxu0 0.0
    %1698 = vmatpush2.msra.mxu0 0.0
    %1699 = vmatprep.subr.mxu0 0.0
    %1700 = vmatpush2.msra.mxu0 0.0
    %1701 = vmatprep.subr.mxu0 0.0
    %1702 = vmatpush2.msra.mxu0 0.0
    %1703 = vmatprep.subr.mxu0 0.0
    %1704 = vmatpush2.msra.mxu0 0.0
    %1705 = vmatprep.subr.mxu0 0.0
    %1706 = vmatpush2.msra.mxu0 0.0
    %1707 = vmatprep.subr.mxu0 0.0
    %1708 = vmatpush2.msra.mxu0 0.0
    %1709 = vmatprep.subr.mxu0 0.0
    %1710 = vmatpush2.msra.mxu0 0.0
    %1711 = vmatprep.subr.mxu0 0.0
    %1712 = vmatpush2.msra.mxu0 0.0
    %1713 = vmatprep.subr.mxu0 0.0
    %1714 = vmatpush2.msra.mxu0 0.0
    %1715 = vmatprep.mubr.f32.mxu0 0.0
    %1716 = vmatmul.mubr.f32.gmra.mxu0 %v1649
    %v1717 = vpop.f32.mrf.mxu0
    %v1718 = vadd.f32 %v1646, %v1717
    %v1719 = vpop.f32.mrf.mxu0
    %1720 = vdwg.mxu0
    %v1722 = vrot.slane %v1718, 5
    %v1724 = vsel %vm1567, %v1537, %v1722
    %vm1725 = vcmask 13312
    %1726 = vst.msk [vmem:[%s13] sm:$0x3f] %vm1725, %v1724
    %v1731 = vcombine.low %v1574, %v1581
    %v1732 = vcombine.low %v1611, %v1618
    %v1734 = vunpack.c.l.s4 1966171168
    %v1735 = vunpack.c.0.s8 %v1734
    %v1736 = vlaneseq
    %v1737 = vshrl.u32 %v1736, 7
    %v1738 = vsub.s32 %v1735, %v1737
    %v1739 = vrot.slane %v1731, %v1738
    %v1741 = vunpack.c.l.s4 1966171168
    %v1742 = vunpack.c.0.s8 %v1741
    %v1743 = vlaneseq
    %v1744 = vshrl.u32 %v1743, 7
    %v1745 = vsub.s32 %v1742, %v1744
    %v1746 = vrot.slane %v1732, %v1745
    %v1747 = vcombine.low %v1739, %v1746
    %v1749 = vunpack.c.l.s4 1966171168
    %v1750 = vunpack.c.0.s8 %v1749
    %v1751 = vlaneseq
    %v1752 = vshrl.u32 %v1751, 7
    %v1753 = vsub.s32 %v1750, %v1752
    %v1754 = vrot.slane %v1747, %v1753
    %v1756 = vlaneseq
    %vm1757 = vcmp.ge.s32.totalorder %v1756, 0
    %vm1758 = vcmp.lt.s32.totalorder %v1756, 512
    %vm1759 = vmand %vm1757, %vm1758
    %1760 = vst.msk [vmem:[#allocation2] sm:$0xf] %vm1759, %v1754
    // Predicated region
    $region54: #{tpu_custom_call.1} parent=1 // pred_check
      _
    $region55: #{tpu_custom_call.1} parent=1 // pred_check_branch
      %1762 = sbr.rel (0) target = $region57
    $region56: #{tpu_custom_call.1} parent=1 // pred_region
      _
    $region57: #{tpu_custom_call.1} parent=1 // pred_fallthru
      _
    // Predicated region
    $region58: #{tpu_custom_call.1} parent=1 // pred_check
      _
    $region59: #{tpu_custom_call.1} parent=1 // pred_check_branch
      %1764 = sbr.rel (0) target = $region61
    $region60: #{tpu_custom_call.1} parent=1 // pred_region
      %s1766 = ssub.s32 64, 64
      %1767 = vsyncadd [#allocation3], %s1766
      %s1769 = sshll.u32 [#allocation2], 4
      %s1770 = int_to_ptr.vmem [resolvable:$true] %s1769
      %1772 = dma.vmem_to_hbm [thread:$0]  %s1770, 64, %s14, [#allocation3]
    $region61: #{tpu_custom_call.1} parent=1 // pred_fallthru
      _
    // Predicated region
    $region62: #{tpu_custom_call.1} parent=1 // pred_check
      _
    $region63: #{tpu_custom_call.1} parent=1 // pred_check_branch
      %1774 = sbr.rel (0) target = $region65
    $region64: #{tpu_custom_call.1} parent=1 // pred_region
      _
    $region65: #{tpu_custom_call.1} parent=1 // pred_fallthru
      _
    // Predicated region
    $region66: #{tpu_custom_call.1} parent=1 // pred_check
      _
    $region67: #{tpu_custom_call.1} parent=1 // pred_check_branch
      %1776 = sbr.rel (0) target = $region69
    $region68: #{tpu_custom_call.1} parent=1 // pred_region
      %1777 = dma.done [#allocation3], 64
    $region69: #{tpu_custom_call.1} parent=1 // pred_fallthru
      _
    %1778 = vsyncpa [#allocation3], 1

</llo_original>
